<compile_context>
chip_gen: v7x
topology: tpu7x:2x2x1
jax: 0.10.0
libtpu: 0.0.40
codegen_flags: <defaults>
</compile_context>

<pallas_src>
import functools

import jax
import jax.numpy as jnp
import numpy as np
from jax import lax
from jax.experimental import pallas as pl
from jax.experimental.pallas import tpu as pltpu


# --------------------------- fused ConvBlock kernel --------------------------


def _conv_block_kernel(x_ref, w1_ref, b1_ref, g1_ref, be1_ref,
                       w2t_ref, b2_ref, g2_ref, be2_ref, o_ref, *,
                       fw, dilation, batch_norm, eps):
    # x_ref:   (N, H, W, Cin)            channels-last input
    # w1_ref:  (fw, Cin, Cout1)
    # b1/g1/be1: (1, Cout1)
    # w2t_ref: (fw, Cout2, Cout1)        per-tap transposed conv2 weight
    # b2/g2/be2: (Cout2, 1)
    # o_ref:   (Cout2, N*Ho2*W)          lane-dense, channel-major output
    N, H, W, Cin = x_ref.shape
    Cout1 = w1_ref.shape[2]
    Cout2, M2 = o_ref.shape
    Ho1 = H - (fw - 1) * dilation
    Ho2 = Ho1 - (fw - 1) * dilation
    M1 = N * Ho1 * W

    x = x_ref[...].astype(jnp.float32)
    w1 = w1_ref[...].astype(jnp.float32)

    # ---- conv1 + bias + ReLU (batch folded into the matmul M dimension) ----
    acc1 = jnp.zeros((M1, Cout1), jnp.float32)
    for t in range(fw):                      # static, fully unrolled (fw small)
        xs = x[:, t * dilation: t * dilation + Ho1, :, :].reshape(M1, Cin)
        acc1 = acc1 + jnp.dot(xs, w1[t], preferred_element_type=jnp.float32)
    h = jnp.maximum(acc1 + b1_ref[...].astype(jnp.float32), 0.0)

    if batch_norm:                           # training-mode BN, biased variance
        mu = jnp.mean(h, axis=0, keepdims=True)
        var = jnp.mean(jnp.square(h - mu), axis=0, keepdims=True)
        h = (h - mu) * lax.rsqrt(var + eps)
        h = h * g1_ref[...].astype(jnp.float32) + be1_ref[...].astype(jnp.float32)

    # ---- conv2 + bias + ReLU, channel-major so epilogue+store are lane-dense -
    h4 = h.reshape(N, Ho1, W, Cout1)
    w2t = w2t_ref[...].astype(jnp.float32)   # (fw, Cout2, Cout1)
    acc2 = jnp.zeros((Cout2, M2), jnp.float32)
    for t in range(fw):
        hs = h4[:, t * dilation: t * dilation + Ho2, :, :].reshape(M2, Cout1)
        # (Cout2, Cout1) x (M2, Cout1)^T -> (Cout2, M2)   (A @ B^T pattern)
        acc2 = acc2 + lax.dot_general(
            w2t[t], hs, (((1,), (1,)), ((), ())),
            preferred_element_type=jnp.float32)
    y = jnp.maximum(acc2 + b2_ref[...].astype(jnp.float32), 0.0)

    if batch_norm:
        mu = jnp.mean(y, axis=1, keepdims=True)
        var = jnp.mean(jnp.square(y - mu), axis=1, keepdims=True)
        y = (y - mu) * lax.rsqrt(var + eps)
        y = y * g2_ref[...].astype(jnp.float32) + be2_ref[...].astype(jnp.float32)

    o_ref[...] = y.astype(o_ref.dtype)       # (8, 128): full-vreg stores


def conv_block_forward(params, x_nchw, *, dilation, batch_norm, eps=1e-5):
    # TODO(synk): BatchNorm running_mean/var buffer updates (training-time
    # module state) are not produced; forward normalization uses batch stats,
    # matching PyTorch training-mode outputs.
    N, Cin, H, W = x_nchw.shape
    fw, _, Cout1 = params["w1"].shape
    Cout2 = params["w2"].shape[2]
    Ho1 = H - (fw - 1) * dilation
    Ho2 = Ho1 - (fw - 1) * dilation
    assert Ho2 >= 1, "input too short for two dilated convolutions"
    M2 = N * Ho2 * W

    # Boundary layout plumbing only (few KiB): channels-last in, and conv2's
    # weight pre-transposed per tap so the kernel's last matmul is A @ B^T.
    x = jnp.transpose(x_nchw, (0, 2, 3, 1))            # (N, H, W, Cin)
    w2t = jnp.transpose(params["w2"], (0, 2, 1))       # (fw, Cout2, Cout1)
    row = lambda v: v.reshape(1, -1)
    col = lambda v: v.reshape(-1, 1)

    kernel = functools.partial(_conv_block_kernel, fw=fw, dilation=dilation,
                               batch_norm=batch_norm, eps=eps)
    out = pl.pallas_call(
        kernel,
        out_shape=jax.ShapeDtypeStruct((Cout2, M2), x_nchw.dtype),
        in_specs=[pl.BlockSpec(memory_space=pltpu.MemorySpace.VMEM)] * 9,
        out_specs=pl.BlockSpec(memory_space=pltpu.MemorySpace.VMEM),
    )(x, params["w1"], row(params["b1"]), row(params["g1"]), row(params["be1"]),
      w2t, col(params["b2"]), col(params["g2"]), col(params["be2"]))

    # (Cout2, N*Ho2*W) -> NCHW (N, Cout2, Ho2, W); 4 KiB relabel outside kernel.
    return jnp.transpose(out.reshape(Cout2, N, Ho2, W), (1, 0, 2, 3))


# ------------------------------ params / reference ---------------------------


def init_conv_block_params(key, filter_width, input_filters, nb_filters):
    ks = jax.random.split(key, 8)
    scale1 = 1.0 / np.sqrt(input_filters * filter_width)
    scale2 = 1.0 / np.sqrt(nb_filters * filter_width)
    return dict(
        # conv weights stored as (filter_width, Cin, Cout)
        w1=jax.random.uniform(ks[0], (filter_width, input_filters, nb_filters),
                              jnp.float32, -scale1, scale1),
        b1=jax.random.uniform(ks[1], (nb_filters,), jnp.float32, -scale1, scale1),
        w2=jax.random.uniform(ks[2], (filter_width, nb_filters, nb_filters),
                              jnp.float32, -scale2, scale2),
        b2=jax.random.uniform(ks[3], (nb_filters,), jnp.float32, -scale2, scale2),
        g1=jax.random.uniform(ks[4], (nb_filters,), jnp.float32, 0.5, 1.5),
        be1=0.1 * jax.random.normal(ks[5], (nb_filters,), jnp.float32),
        g2=jax.random.uniform(ks[6], (nb_filters,), jnp.float32, 0.5, 1.5),
        be2=0.1 * jax.random.normal(ks[7], (nb_filters,), jnp.float32),
    )


def _ref_conv(x_nhwc, w_fio, bias, dilation):
    fw, Cin, Cout = w_fio.shape
    w_hwio = w_fio.reshape(fw, 1, Cin, Cout)
    y = lax.conv_general_dilated(
        x_nhwc, w_hwio, window_strides=(1, 1), padding="VALID",
        rhs_dilation=(dilation, 1),
        dimension_numbers=("NHWC", "HWIO", "NHWC"))
    return y + bias[None, None, None, :]


def _ref_bn(x, g, b, eps=1e-5):
    mean = jnp.mean(x, axis=(0, 1, 2), keepdims=True)
    var = jnp.mean(jnp.square(x - mean), axis=(0, 1, 2), keepdims=True)
    return (x - mean) * lax.rsqrt(var + eps) * g + b


def conv_block_reference(params, x_nchw, *, dilation, batch_norm):
    x = jnp.transpose(x_nchw, (0, 2, 3, 1))
    out = jnp.maximum(_ref_conv(x, params["w1"], params["b1"], dilation), 0.0)
    if batch_norm:
        out = _ref_bn(out, params["g1"], params["be1"])
    out = jnp.maximum(_ref_conv(out, params["w2"], params["b2"], dilation), 0.0)
    if batch_norm:
        out = _ref_bn(out, params["g2"], params["be2"])
    return jnp.transpose(out, (0, 3, 1, 2))


# -------------------------------- main ---------------------------------------


if __name__ == "__main__":
    # ConvBlock(filter_width=5, input_filters=4, nb_filters=8, dilation=1,
    #           batch_norm=True); input x is NCHW.
    filter_width, input_filters, nb_filters, dilation, batch_norm = 5, 4, 8, 1, True
    N, H, W = 2, 16, 8  # x: (2, 4, 16, 8) NCHW

    key = jax.random.PRNGKey(0)
    kx, kp = jax.random.split(key)
    x = jax.random.normal(kx, (N, input_filters, H, W), jnp.float32)
    params = init_conv_block_params(kp, filter_width, input_filters, nb_filters)

    out = conv_block_forward(params, x, dilation=dilation, batch_norm=batch_norm)
    out = jax.block_until_ready(out)

    ref = conv_block_reference(params, x, dilation=dilation, batch_norm=batch_norm)
    ref = jax.block_until_ready(ref)

    assert out.shape == ref.shape, (out.shape, ref.shape)
    np.testing.assert_allclose(np.asarray(out), np.asarray(ref),
                               rtol=1e-4, atol=1e-4)
    print("KERNEL_OK")
</pallas_src>

<mosaic_0001>
module attributes {stable_mosaic.version = 11 : i64} {
  func.func @_conv_block_kernel(%arg0: memref<2x16x8x4xf32, #tpu.memory_space<vmem>>, %arg1: memref<5x4x8xf32, #tpu.memory_space<vmem>>, %arg2: memref<1x8xf32, #tpu.memory_space<vmem>>, %arg3: memref<1x8xf32, #tpu.memory_space<vmem>>, %arg4: memref<1x8xf32, #tpu.memory_space<vmem>>, %arg5: memref<5x8x8xf32, #tpu.memory_space<vmem>>, %arg6: memref<8x1xf32, #tpu.memory_space<vmem>>, %arg7: memref<8x1xf32, #tpu.memory_space<vmem>>, %arg8: memref<8x1xf32, #tpu.memory_space<vmem>>, %arg9: memref<8x128xf32, #tpu.memory_space<vmem>>) attributes {dimension_semantics = [], scalar_prefetch = 0 : i64, scratch_operands = 0 : i64, tpu.core_type = #tpu.core_type<tc>} {
    %c0 = arith.constant 0 : index
    %c0_0 = arith.constant 0 : index
    %c0_1 = arith.constant 0 : index
    %c0_2 = arith.constant 0 : index
    %0 = vector.load %arg0[%c0, %c0_0, %c0_1, %c0_2] : memref<2x16x8x4xf32, #tpu.memory_space<vmem>>, vector<2x16x8x4xf32>
    %c0_3 = arith.constant 0 : index
    %c0_4 = arith.constant 0 : index
    %c0_5 = arith.constant 0 : index
    %1 = vector.load %arg1[%c0_3, %c0_4, %c0_5] : memref<5x4x8xf32, #tpu.memory_space<vmem>>, vector<5x4x8xf32>
    %cst = arith.constant 0.000000e+00 : f32
    %2 = vector.broadcast %cst : f32 to vector<192x8xf32>
    %3 = vector.extract_strided_slice %0 {offsets = [0, 0, 0, 0], sizes = [2, 12, 8, 4], strides = [1, 1, 1, 1]} : vector<2x16x8x4xf32> to vector<2x12x8x4xf32>
    %4 = vector.shape_cast %3 : vector<2x12x8x4xf32> to vector<192x4xf32>
    %5 = vector.extract_strided_slice %1 {offsets = [0, 0, 0], sizes = [1, 4, 8], strides = [1, 1, 1]} : vector<5x4x8xf32> to vector<1x4x8xf32>
    %6 = vector.shape_cast %5 : vector<1x4x8xf32> to vector<4x8xf32>
    %cst_6 = arith.constant dense<0.000000e+00> : vector<192x8xf32>
    %7 = tpu.matmul %4, %6, %cst_6 {dimension_numbers = #tpu.dot_dimension_numbers<[1], [0], [0], [1], [0, 0, 1, 1], [], []>} : vector<192x4xf32>, vector<4x8xf32>, vector<192x8xf32> -> vector<192x8xf32>
    %8 = arith.addf %2, %7 : vector<192x8xf32>
    %9 = vector.extract_strided_slice %0 {offsets = [0, 1, 0, 0], sizes = [2, 12, 8, 4], strides = [1, 1, 1, 1]} : vector<2x16x8x4xf32> to vector<2x12x8x4xf32>
    %10 = vector.shape_cast %9 : vector<2x12x8x4xf32> to vector<192x4xf32>
    %11 = vector.extract_strided_slice %1 {offsets = [1, 0, 0], sizes = [1, 4, 8], strides = [1, 1, 1]} : vector<5x4x8xf32> to vector<1x4x8xf32>
    %12 = vector.shape_cast %11 : vector<1x4x8xf32> to vector<4x8xf32>
    %cst_7 = arith.constant dense<0.000000e+00> : vector<192x8xf32>
    %13 = tpu.matmul %10, %12, %cst_7 {dimension_numbers = #tpu.dot_dimension_numbers<[1], [0], [0], [1], [0, 0, 1, 1], [], []>} : vector<192x4xf32>, vector<4x8xf32>, vector<192x8xf32> -> vector<192x8xf32>
    %14 = arith.addf %8, %13 : vector<192x8xf32>
    %15 = vector.extract_strided_slice %0 {offsets = [0, 2, 0, 0], sizes = [2, 12, 8, 4], strides = [1, 1, 1, 1]} : vector<2x16x8x4xf32> to vector<2x12x8x4xf32>
    %16 = vector.shape_cast %15 : vector<2x12x8x4xf32> to vector<192x4xf32>
    %17 = vector.extract_strided_slice %1 {offsets = [2, 0, 0], sizes = [1, 4, 8], strides = [1, 1, 1]} : vector<5x4x8xf32> to vector<1x4x8xf32>
    %18 = vector.shape_cast %17 : vector<1x4x8xf32> to vector<4x8xf32>
    %cst_8 = arith.constant dense<0.000000e+00> : vector<192x8xf32>
    %19 = tpu.matmul %16, %18, %cst_8 {dimension_numbers = #tpu.dot_dimension_numbers<[1], [0], [0], [1], [0, 0, 1, 1], [], []>} : vector<192x4xf32>, vector<4x8xf32>, vector<192x8xf32> -> vector<192x8xf32>
    %20 = arith.addf %14, %19 : vector<192x8xf32>
    %21 = vector.extract_strided_slice %0 {offsets = [0, 3, 0, 0], sizes = [2, 12, 8, 4], strides = [1, 1, 1, 1]} : vector<2x16x8x4xf32> to vector<2x12x8x4xf32>
    %22 = vector.shape_cast %21 : vector<2x12x8x4xf32> to vector<192x4xf32>
    %23 = vector.extract_strided_slice %1 {offsets = [3, 0, 0], sizes = [1, 4, 8], strides = [1, 1, 1]} : vector<5x4x8xf32> to vector<1x4x8xf32>
    %24 = vector.shape_cast %23 : vector<1x4x8xf32> to vector<4x8xf32>
    %cst_9 = arith.constant dense<0.000000e+00> : vector<192x8xf32>
    %25 = tpu.matmul %22, %24, %cst_9 {dimension_numbers = #tpu.dot_dimension_numbers<[1], [0], [0], [1], [0, 0, 1, 1], [], []>} : vector<192x4xf32>, vector<4x8xf32>, vector<192x8xf32> -> vector<192x8xf32>
    %26 = arith.addf %20, %25 : vector<192x8xf32>
    %27 = vector.extract_strided_slice %0 {offsets = [0, 4, 0, 0], sizes = [2, 12, 8, 4], strides = [1, 1, 1, 1]} : vector<2x16x8x4xf32> to vector<2x12x8x4xf32>
    %28 = vector.shape_cast %27 : vector<2x12x8x4xf32> to vector<192x4xf32>
    %29 = vector.extract_strided_slice %1 {offsets = [4, 0, 0], sizes = [1, 4, 8], strides = [1, 1, 1]} : vector<5x4x8xf32> to vector<1x4x8xf32>
    %30 = vector.shape_cast %29 : vector<1x4x8xf32> to vector<4x8xf32>
    %cst_10 = arith.constant dense<0.000000e+00> : vector<192x8xf32>
    %31 = tpu.matmul %28, %30, %cst_10 {dimension_numbers = #tpu.dot_dimension_numbers<[1], [0], [0], [1], [0, 0, 1, 1], [], []>} : vector<192x4xf32>, vector<4x8xf32>, vector<192x8xf32> -> vector<192x8xf32>
    %32 = arith.addf %26, %31 : vector<192x8xf32>
    %c0_11 = arith.constant 0 : index
    %c0_12 = arith.constant 0 : index
    %33 = vector.load %arg2[%c0_11, %c0_12] : memref<1x8xf32, #tpu.memory_space<vmem>>, vector<1x8xf32>
    %34 = vector.broadcast %33 : vector<1x8xf32> to vector<192x8xf32>
    %35 = arith.addf %32, %34 : vector<192x8xf32>
    %cst_13 = arith.constant 0.000000e+00 : f32
    %36 = vector.broadcast %cst_13 : f32 to vector<192x8xf32>
    %37 = arith.maximumf %35, %36 : vector<192x8xf32>
    %cst_14 = arith.constant dense<0.000000e+00> : vector<8xf32>
    %38 = vector.multi_reduction <add>, %37, %cst_14 [0] : vector<192x8xf32> to vector<8xf32>
    %39 = vector.shape_cast %38 : vector<8xf32> to vector<1x8xf32>
    %cst_15 = arith.constant 1.920000e+02 : f32
    %40 = vector.broadcast %cst_15 : f32 to vector<1x8xf32>
    %41 = arith.divf %39, %40 : vector<1x8xf32>
    %42 = vector.broadcast %41 : vector<1x8xf32> to vector<192x8xf32>
    %43 = arith.subf %37, %42 : vector<192x8xf32>
    %44 = arith.mulf %43, %43 : vector<192x8xf32>
    %cst_16 = arith.constant dense<0.000000e+00> : vector<8xf32>
    %45 = vector.multi_reduction <add>, %44, %cst_16 [0] : vector<192x8xf32> to vector<8xf32>
    %46 = vector.shape_cast %45 : vector<8xf32> to vector<1x8xf32>
    %cst_17 = arith.constant 1.920000e+02 : f32
    %47 = vector.broadcast %cst_17 : f32 to vector<1x8xf32>
    %48 = arith.divf %46, %47 : vector<1x8xf32>
    %49 = vector.broadcast %41 : vector<1x8xf32> to vector<192x8xf32>
    %50 = arith.subf %37, %49 : vector<192x8xf32>
    %cst_18 = arith.constant 9.99999974E-6 : f32
    %51 = vector.broadcast %cst_18 : f32 to vector<1x8xf32>
    %52 = arith.addf %48, %51 : vector<1x8xf32>
    %53 = math.rsqrt %52 : vector<1x8xf32>
    %54 = vector.broadcast %53 : vector<1x8xf32> to vector<192x8xf32>
    %55 = arith.mulf %50, %54 : vector<192x8xf32>
    %c0_19 = arith.constant 0 : index
    %c0_20 = arith.constant 0 : index
    %56 = vector.load %arg3[%c0_19, %c0_20] : memref<1x8xf32, #tpu.memory_space<vmem>>, vector<1x8xf32>
    %57 = vector.broadcast %56 : vector<1x8xf32> to vector<192x8xf32>
    %58 = arith.mulf %55, %57 : vector<192x8xf32>
    %c0_21 = arith.constant 0 : index
    %c0_22 = arith.constant 0 : index
    %59 = vector.load %arg4[%c0_21, %c0_22] : memref<1x8xf32, #tpu.memory_space<vmem>>, vector<1x8xf32>
    %60 = vector.broadcast %59 : vector<1x8xf32> to vector<192x8xf32>
    %61 = arith.addf %58, %60 : vector<192x8xf32>
    %62 = vector.shape_cast %61 : vector<192x8xf32> to vector<2x12x8x8xf32>
    %c0_23 = arith.constant 0 : index
    %c0_24 = arith.constant 0 : index
    %c0_25 = arith.constant 0 : index
    %63 = vector.load %arg5[%c0_23, %c0_24, %c0_25] : memref<5x8x8xf32, #tpu.memory_space<vmem>>, vector<5x8x8xf32>
    %cst_26 = arith.constant 0.000000e+00 : f32
    %64 = vector.broadcast %cst_26 : f32 to vector<8x128xf32>
    %65 = vector.extract_strided_slice %62 {offsets = [0, 0, 0, 0], sizes = [2, 8, 8, 8], strides = [1, 1, 1, 1]} : vector<2x12x8x8xf32> to vector<2x8x8x8xf32>
    %66 = vector.shape_cast %65 : vector<2x8x8x8xf32> to vector<128x8xf32>
    %67 = vector.extract_strided_slice %63 {offsets = [0, 0, 0], sizes = [1, 8, 8], strides = [1, 1, 1]} : vector<5x8x8xf32> to vector<1x8x8xf32>
    %68 = vector.shape_cast %67 : vector<1x8x8xf32> to vector<8x8xf32>
    %cst_27 = arith.constant dense<0.000000e+00> : vector<8x128xf32>
    %69 = tpu.matmul %68, %66, %cst_27 {dimension_numbers = #tpu.dot_dimension_numbers<[1], [1], [0], [0], [0, 0, 1, 0], [], []>} : vector<8x8xf32>, vector<128x8xf32>, vector<8x128xf32> -> vector<8x128xf32>
    %70 = arith.addf %64, %69 : vector<8x128xf32>
    %71 = vector.extract_strided_slice %62 {offsets = [0, 1, 0, 0], sizes = [2, 8, 8, 8], strides = [1, 1, 1, 1]} : vector<2x12x8x8xf32> to vector<2x8x8x8xf32>
    %72 = vector.shape_cast %71 : vector<2x8x8x8xf32> to vector<128x8xf32>
    %73 = vector.extract_strided_slice %63 {offsets = [1, 0, 0], sizes = [1, 8, 8], strides = [1, 1, 1]} : vector<5x8x8xf32> to vector<1x8x8xf32>
    %74 = vector.shape_cast %73 : vector<1x8x8xf32> to vector<8x8xf32>
    %cst_28 = arith.constant dense<0.000000e+00> : vector<8x128xf32>
    %75 = tpu.matmul %74, %72, %cst_28 {dimension_numbers = #tpu.dot_dimension_numbers<[1], [1], [0], [0], [0, 0, 1, 0], [], []>} : vector<8x8xf32>, vector<128x8xf32>, vector<8x128xf32> -> vector<8x128xf32>
    %76 = arith.addf %70, %75 : vector<8x128xf32>
    %77 = vector.extract_strided_slice %62 {offsets = [0, 2, 0, 0], sizes = [2, 8, 8, 8], strides = [1, 1, 1, 1]} : vector<2x12x8x8xf32> to vector<2x8x8x8xf32>
    %78 = vector.shape_cast %77 : vector<2x8x8x8xf32> to vector<128x8xf32>
    %79 = vector.extract_strided_slice %63 {offsets = [2, 0, 0], sizes = [1, 8, 8], strides = [1, 1, 1]} : vector<5x8x8xf32> to vector<1x8x8xf32>
    %80 = vector.shape_cast %79 : vector<1x8x8xf32> to vector<8x8xf32>
    %cst_29 = arith.constant dense<0.000000e+00> : vector<8x128xf32>
    %81 = tpu.matmul %80, %78, %cst_29 {dimension_numbers = #tpu.dot_dimension_numbers<[1], [1], [0], [0], [0, 0, 1, 0], [], []>} : vector<8x8xf32>, vector<128x8xf32>, vector<8x128xf32> -> vector<8x128xf32>
    %82 = arith.addf %76, %81 : vector<8x128xf32>
    %83 = vector.extract_strided_slice %62 {offsets = [0, 3, 0, 0], sizes = [2, 8, 8, 8], strides = [1, 1, 1, 1]} : vector<2x12x8x8xf32> to vector<2x8x8x8xf32>
    %84 = vector.shape_cast %83 : vector<2x8x8x8xf32> to vector<128x8xf32>
    %85 = vector.extract_strided_slice %63 {offsets = [3, 0, 0], sizes = [1, 8, 8], strides = [1, 1, 1]} : vector<5x8x8xf32> to vector<1x8x8xf32>
    %86 = vector.shape_cast %85 : vector<1x8x8xf32> to vector<8x8xf32>
    %cst_30 = arith.constant dense<0.000000e+00> : vector<8x128xf32>
    %87 = tpu.matmul %86, %84, %cst_30 {dimension_numbers = #tpu.dot_dimension_numbers<[1], [1], [0], [0], [0, 0, 1, 0], [], []>} : vector<8x8xf32>, vector<128x8xf32>, vector<8x128xf32> -> vector<8x128xf32>
    %88 = arith.addf %82, %87 : vector<8x128xf32>
    %89 = vector.extract_strided_slice %62 {offsets = [0, 4, 0, 0], sizes = [2, 8, 8, 8], strides = [1, 1, 1, 1]} : vector<2x12x8x8xf32> to vector<2x8x8x8xf32>
    %90 = vector.shape_cast %89 : vector<2x8x8x8xf32> to vector<128x8xf32>
    %91 = vector.extract_strided_slice %63 {offsets = [4, 0, 0], sizes = [1, 8, 8], strides = [1, 1, 1]} : vector<5x8x8xf32> to vector<1x8x8xf32>
    %92 = vector.shape_cast %91 : vector<1x8x8xf32> to vector<8x8xf32>
    %cst_31 = arith.constant dense<0.000000e+00> : vector<8x128xf32>
    %93 = tpu.matmul %92, %90, %cst_31 {dimension_numbers = #tpu.dot_dimension_numbers<[1], [1], [0], [0], [0, 0, 1, 0], [], []>} : vector<8x8xf32>, vector<128x8xf32>, vector<8x128xf32> -> vector<8x128xf32>
    %94 = arith.addf %88, %93 : vector<8x128xf32>
    %c0_32 = arith.constant 0 : index
    %c0_33 = arith.constant 0 : index
    %95 = vector.load %arg6[%c0_32, %c0_33] : memref<8x1xf32, #tpu.memory_space<vmem>>, vector<8x1xf32>
    %96 = vector.broadcast %95 : vector<8x1xf32> to vector<8x128xf32>
    %97 = arith.addf %94, %96 : vector<8x128xf32>
    %cst_34 = arith.constant 0.000000e+00 : f32
    %98 = vector.broadcast %cst_34 : f32 to vector<8x128xf32>
    %99 = arith.maximumf %97, %98 : vector<8x128xf32>
    %cst_35 = arith.constant dense<0.000000e+00> : vector<8xf32>
    %100 = vector.multi_reduction <add>, %99, %cst_35 [1] : vector<8x128xf32> to vector<8xf32>
    %101 = vector.shape_cast %100 : vector<8xf32> to vector<8x1xf32>
    %cst_36 = arith.constant 1.280000e+02 : f32
    %102 = vector.broadcast %cst_36 : f32 to vector<8x1xf32>
    %103 = arith.divf %101, %102 : vector<8x1xf32>
    %104 = vector.broadcast %103 : vector<8x1xf32> to vector<8x128xf32>
    %105 = arith.subf %99, %104 : vector<8x128xf32>
    %106 = arith.mulf %105, %105 : vector<8x128xf32>
    %cst_37 = arith.constant dense<0.000000e+00> : vector<8xf32>
    %107 = vector.multi_reduction <add>, %106, %cst_37 [1] : vector<8x128xf32> to vector<8xf32>
    %108 = vector.shape_cast %107 : vector<8xf32> to vector<8x1xf32>
    %cst_38 = arith.constant 1.280000e+02 : f32
    %109 = vector.broadcast %cst_38 : f32 to vector<8x1xf32>
    %110 = arith.divf %108, %109 : vector<8x1xf32>
    %111 = vector.broadcast %103 : vector<8x1xf32> to vector<8x128xf32>
    %112 = arith.subf %99, %111 : vector<8x128xf32>
    %cst_39 = arith.constant 9.99999974E-6 : f32
    %113 = vector.broadcast %cst_39 : f32 to vector<8x1xf32>
    %114 = arith.addf %110, %113 : vector<8x1xf32>
    %115 = math.rsqrt %114 : vector<8x1xf32>
    %116 = vector.broadcast %115 : vector<8x1xf32> to vector<8x128xf32>
    %117 = arith.mulf %112, %116 : vector<8x128xf32>
    %c0_40 = arith.constant 0 : index
    %c0_41 = arith.constant 0 : index
    %118 = vector.load %arg7[%c0_40, %c0_41] : memref<8x1xf32, #tpu.memory_space<vmem>>, vector<8x1xf32>
    %119 = vector.broadcast %118 : vector<8x1xf32> to vector<8x128xf32>
    %120 = arith.mulf %117, %119 : vector<8x128xf32>
    %c0_42 = arith.constant 0 : index
    %c0_43 = arith.constant 0 : index
    %121 = vector.load %arg8[%c0_42, %c0_43] : memref<8x1xf32, #tpu.memory_space<vmem>>, vector<8x1xf32>
    %122 = vector.broadcast %121 : vector<8x1xf32> to vector<8x128xf32>
    %123 = arith.addf %120, %122 : vector<8x128xf32>
    %c0_44 = arith.constant 0 : index
    %c0_45 = arith.constant 0 : index
    %124 = vector.load %arg9[%c0_44, %c0_45] : memref<8x128xf32, #tpu.memory_space<vmem>>, vector<8x128xf32>
    tpu.vector_store %arg9[%c0_44, %c0_45], %123 {strides = array<i32>} : memref<8x128xf32, #tpu.memory_space<vmem>>, vector<8x128xf32>,
    return
  }
}

</mosaic_0001>

<llo_original>
// kernel: tpu_custom_call.1
$region0: #{tpu_custom_call.1}
  #allocation0 [shape = 'u32[]', space=smem, size = 0x4, offset = 0x4, fixed_abs, tag = 'smem constant byte address 0x4 - core index']
  #allocation1 [shape = 'u32[144,128]{1,0:T(1,128)}', space=vmem, size = 0x12000, scoped, tag = 'internal scratch']
  %s0 = inlined_call_operand.vmem [shape: f32[2,16,8,4], index: 0, kind: input, shape index: {}]
  %s1 = inlined_call_operand.vmem [shape: f32[5,4,8], index: 1, kind: input, shape index: {}]
  %s2 = inlined_call_operand.vmem [shape: f32[1,8], index: 2, kind: input, shape index: {}]
  %s3 = inlined_call_operand.vmem [shape: f32[1,8], index: 3, kind: input, shape index: {}]
  %s4 = inlined_call_operand.vmem [shape: f32[1,8], index: 4, kind: input, shape index: {}]
  %s5 = inlined_call_operand.vmem [shape: f32[5,8,8], index: 5, kind: input, shape index: {}]
  %s6 = inlined_call_operand.vmem [shape: f32[8,1], index: 6, kind: input, shape index: {}]
  %s7 = inlined_call_operand.vmem [shape: f32[8,1], index: 7, kind: input, shape index: {}]
  %s8 = inlined_call_operand.vmem [shape: f32[8,1], index: 8, kind: input, shape index: {}]
  %s9 = inlined_call_operand.hbm [shape: f32[8,128], index: 9, kind: output, shape index: {}]
  %s10 = sld [smem:[#allocation0]]
  $region46: #{tpu_custom_call.1} parent=0
    _
  %s12 = ssub.s32 1, %s10
  %s13 = scalar_select 0, %s12, %s10
  $region1: #{tpu_custom_call.1} parent=0
    #allocation2 [shape = 'u8[4096]{0}', space=vmem, size = 0x1000, scoped, tag = 'output window, operand 0, single buffered']
    #allocation3 [shape = 's32[1]{0}', space=sflag, size = 0x4, scoped, tag = 'scoped memory for tpu_custom_call.1']
    %14 = vsyncpa [#allocation3], 0
    // Predicated region
    $region2: #{tpu_custom_call.1} parent=1 // pred_check
      _
    $region3: #{tpu_custom_call.1} parent=1 // pred_check_branch
      %16 = sbr.rel (0) target = $region5
    $region4: #{tpu_custom_call.1} parent=1 // pred_region
      _
    $region5: #{tpu_custom_call.1} parent=1 // pred_fallthru
      _
    // Predicated region
    $region6: #{tpu_custom_call.1} parent=1 // pred_check
      _
    $region7: #{tpu_custom_call.1} parent=1 // pred_check_branch
      %18 = sbr.rel (0) target = $region9
    $region8: #{tpu_custom_call.1} parent=1 // pred_region
      _
    $region9: #{tpu_custom_call.1} parent=1 // pred_fallthru
      _
    // Predicated region
    $region10: #{tpu_custom_call.1} parent=1 // pred_check
      _
    $region11: #{tpu_custom_call.1} parent=1 // pred_check_branch
      %20 = sbr.rel (0) target = $region13
    $region12: #{tpu_custom_call.1} parent=1 // pred_region
      _
    $region13: #{tpu_custom_call.1} parent=1 // pred_fallthru
      _
    // Predicated region
    $region14: #{tpu_custom_call.1} parent=1 // pred_check
      _
    $region15: #{tpu_custom_call.1} parent=1 // pred_check_branch
      %22 = sbr.rel (0) target = $region17
    $region16: #{tpu_custom_call.1} parent=1 // pred_region
      _
    $region17: #{tpu_custom_call.1} parent=1 // pred_fallthru
      _
    // Predicated region
    $region18: #{tpu_custom_call.1} parent=1 // pred_check
      _
    $region19: #{tpu_custom_call.1} parent=1 // pred_check_branch
      %24 = sbr.rel (0) target = $region21
    $region20: #{tpu_custom_call.1} parent=1 // pred_region
      _
    $region21: #{tpu_custom_call.1} parent=1 // pred_fallthru
      _
    // Predicated region
    $region22: #{tpu_custom_call.1} parent=1 // pred_check
      _
    $region23: #{tpu_custom_call.1} parent=1 // pred_check_branch
      %26 = sbr.rel (0) target = $region25
    $region24: #{tpu_custom_call.1} parent=1 // pred_region
      _
    $region25: #{tpu_custom_call.1} parent=1 // pred_fallthru
      _
    // Predicated region
    $region26: #{tpu_custom_call.1} parent=1 // pred_check
      _
    $region27: #{tpu_custom_call.1} parent=1 // pred_check_branch
      %28 = sbr.rel (0) target = $region29
    $region28: #{tpu_custom_call.1} parent=1 // pred_region
      _
    $region29: #{tpu_custom_call.1} parent=1 // pred_fallthru
      _
    // Predicated region
    $region30: #{tpu_custom_call.1} parent=1 // pred_check
      _
    $region31: #{tpu_custom_call.1} parent=1 // pred_check_branch
      %30 = sbr.rel (0) target = $region33
    $region32: #{tpu_custom_call.1} parent=1 // pred_region
      _
    $region33: #{tpu_custom_call.1} parent=1 // pred_fallthru
      _
    // Predicated region
    $region34: #{tpu_custom_call.1} parent=1 // pred_check
      _
    $region35: #{tpu_custom_call.1} parent=1 // pred_check_branch
      %32 = sbr.rel (0) target = $region37
    $region36: #{tpu_custom_call.1} parent=1 // pred_region
      _
    $region37: #{tpu_custom_call.1} parent=1 // pred_fallthru
      _
    %v33 = vld [vmem:[%s0] sm:$0xff]
    %v34 = vld [vmem:[%s0 + $0x8] sm:$0xff]
    %v35 = vld [vmem:[%s0 + $0x10] sm:$0xff]
    %v36 = vld [vmem:[%s0 + $0x18] sm:$0xff]
    %v37 = vld [vmem:[%s0 + $0x20] sm:$0xff]
    %v38 = vld [vmem:[%s0 + $0x28] sm:$0xff]
    %v39 = vld [vmem:[%s0 + $0x30] sm:$0xff]
    %v40 = vld [vmem:[%s0 + $0x38] sm:$0xff]
    %v41 = vld [vmem:[%s0 + $0x40] sm:$0xff]
    %v42 = vld [vmem:[%s0 + $0x48] sm:$0xff]
    %v43 = vld [vmem:[%s0 + $0x50] sm:$0xff]
    %v44 = vld [vmem:[%s0 + $0x58] sm:$0xff]
    %v45 = vld [vmem:[%s0 + $0x60] sm:$0xff]
    %v46 = vld [vmem:[%s0 + $0x68] sm:$0xff]
    %v47 = vld [vmem:[%s0 + $0x70] sm:$0xff]
    %v48 = vld [vmem:[%s0 + $0x78] sm:$0xff]
    %v49 = vld [vmem:[%s0 + $0x80] sm:$0xff]
    %v50 = vld [vmem:[%s0 + $0x88] sm:$0xff]
    %v51 = vld [vmem:[%s0 + $0x90] sm:$0xff]
    %v52 = vld [vmem:[%s0 + $0x98] sm:$0xff]
    %v53 = vld [vmem:[%s0 + $0xa0] sm:$0xff]
    %v54 = vld [vmem:[%s0 + $0xa8] sm:$0xff]
    %v55 = vld [vmem:[%s0 + $0xb0] sm:$0xff]
    %v56 = vld [vmem:[%s0 + $0xb8] sm:$0xff]
    %v57 = vld [vmem:[%s0 + $0xc0] sm:$0xff]
    %v58 = vld [vmem:[%s0 + $0xc8] sm:$0xff]
    %v59 = vld [vmem:[%s0 + $0xd0] sm:$0xff]
    %v60 = vld [vmem:[%s0 + $0xd8] sm:$0xff]
    %v61 = vld [vmem:[%s0 + $0xe0] sm:$0xff]
    %v62 = vld [vmem:[%s0 + $0xe8] sm:$0xff]
    %v63 = vld [vmem:[%s0 + $0xf0] sm:$0xff]
    %v64 = vld [vmem:[%s0 + $0xf8] sm:$0xff]
    %v65 = vld [vmem:[%s1] sm:$0xf]
    %v66 = vld [vmem:[%s1 + $0x4] sm:$0xf]
    %v67 = vld [vmem:[%s1 + $0x8] sm:$0xf]
    %v68 = vld [vmem:[%s1 + $0xc] sm:$0xf]
    %v69 = vld [vmem:[%s1 + $0x10] sm:$0xf]
    %vm70 = vcmask 31744
    %v72 = vsel %vm70, %v34, 0
    %v75 = vsel %vm70, %v35, 0
    %v78 = vsel %vm70, %v36, 0
    %v81 = vsel %vm70, %v37, 0
    %v84 = vsel %vm70, %v38, 0
    %v87 = vsel %vm70, %v39, 0
    %v90 = vsel %vm70, %v40, 0
    %v93 = vsel %vm70, %v41, 0
    %v96 = vsel %vm70, %v42, 0
    %v99 = vsel %vm70, %v43, 0
    %v102 = vsel %vm70, %v44, 0
    %v105 = vsel %vm70, %v45, 0
    %v108 = vsel %vm70, %v50, 0
    %v111 = vsel %vm70, %v51, 0
    %v114 = vsel %vm70, %v52, 0
    %v117 = vsel %vm70, %v53, 0
    %v120 = vsel %vm70, %v54, 0
    %v123 = vsel %vm70, %v55, 0
    %v126 = vsel %vm70, %v56, 0
    %v129 = vsel %vm70, %v57, 0
    %v132 = vsel %vm70, %v58, 0
    %v135 = vsel %vm70, %v59, 0
    %v138 = vsel %vm70, %v60, 0
    %v141 = vsel %vm70, %v61, 0
    %vm143 = vcmask 1043456
    %v145 = vsel %vm143, %v66, 0
    %147 = vmatprep.subr.mxu0 0.0
    %148 = vmatpush1.msra.mxu0 %v145
    %149 = vmatprep.subr.mxu0 0.0
    %150 = vmatpush1.msra.mxu0 0.0
    %151 = vmatprep.subr.mxu0 0.0
    %152 = vmatpush1.msra.mxu0 0.0
    %153 = vmatprep.subr.mxu0 0.0
    %154 = vmatpush1.msra.mxu0 0.0
    %155 = vmatprep.subr.mxu0 0.0
    %156 = vmatpush1.msra.mxu0 0.0
    %157 = vmatprep.subr.mxu0 0.0
    %158 = vmatpush1.msra.mxu0 0.0
    %159 = vmatprep.subr.mxu0 0.0
    %160 = vmatpush1.msra.mxu0 0.0
    %161 = vmatprep.subr.mxu0 0.0
    %162 = vmatpush1.msra.mxu0 0.0
    %163 = vmatprep.subr.mxu0 0.0
    %164 = vmatpush1.msra.mxu0 0.0
    %165 = vmatprep.subr.mxu0 0.0
    %166 = vmatpush1.msra.mxu0 0.0
    %167 = vmatprep.subr.mxu0 0.0
    %168 = vmatpush1.msra.mxu0 0.0
    %169 = vmatprep.subr.mxu0 0.0
    %170 = vmatpush1.msra.mxu0 0.0
    %171 = vmatprep.subr.mxu0 0.0
    %172 = vmatpush1.msra.mxu0 0.0
    %173 = vmatprep.subr.mxu0 0.0
    %174 = vmatpush1.msra.mxu0 0.0
    %175 = vmatprep.subr.mxu0 0.0
    %176 = vmatpush1.msra.mxu0 0.0
    %177 = vmatprep.subr.mxu0 0.0
    %178 = vmatpush1.msra.mxu0 0.0
    %179 = vmatprep.subr.mxu0 0.0
    %180 = vmatpush1.msra.mxu0 0.0
    %181 = vmatprep.subr.mxu0 0.0
    %182 = vmatpush1.msra.mxu0 0.0
    %183 = vmatprep.subr.mxu0 0.0
    %184 = vmatpush1.msra.mxu0 0.0
    %185 = vmatprep.subr.mxu0 0.0
    %186 = vmatpush1.msra.mxu0 0.0
    %187 = vmatprep.subr.mxu0 0.0
    %188 = vmatpush1.msra.mxu0 0.0
    %189 = vmatprep.subr.mxu0 0.0
    %190 = vmatpush1.msra.mxu0 0.0
    %191 = vmatprep.subr.mxu0 0.0
    %192 = vmatpush1.msra.mxu0 0.0
    %193 = vmatprep.subr.mxu0 0.0
    %194 = vmatpush1.msra.mxu0 0.0
    %195 = vmatprep.subr.mxu0 0.0
    %196 = vmatpush1.msra.mxu0 0.0
    %197 = vmatprep.subr.mxu0 0.0
    %198 = vmatpush1.msra.mxu0 0.0
    %199 = vmatprep.subr.mxu0 0.0
    %200 = vmatpush1.msra.mxu0 0.0
    %201 = vmatprep.subr.mxu0 0.0
    %202 = vmatpush1.msra.mxu0 0.0
    %203 = vmatprep.subr.mxu0 0.0
    %204 = vmatpush1.msra.mxu0 0.0
    %205 = vmatprep.subr.mxu0 0.0
    %206 = vmatpush1.msra.mxu0 0.0
    %207 = vmatprep.subr.mxu0 0.0
    %208 = vmatpush1.msra.mxu0 0.0
    %209 = vmatprep.subr.mxu0 0.0
    %210 = vmatpush1.msra.mxu0 0.0
    %211 = vmatprep.mubr.f32.mxu0 0.0
    %212 = vmatmul.mubr.f32.gmra.mrb[0].mxu0 %v72
    %v213 = vpop.f32.mrb[0].mxu0
    %v214 = vadd.f32 0.0, %v213
    %v215 = vpop.f32.mrb[0].mxu0
    %216 = vmatprep.mubr.f32.mxu0 0.0
    %217 = vmatmul.mubr.f32.gmra.mrb[0].mxu0 %v75
    %v218 = vpop.f32.mrb[0].mxu0
    %v219 = vadd.f32 0.0, %v218
    %v220 = vpop.f32.mrb[0].mxu0
    %221 = vmatprep.mubr.f32.mxu0 0.0
    %222 = vmatmul.mubr.f32.gmra.mrb[0].mxu0 %v78
    %v223 = vpop.f32.mrb[0].mxu0
    %v224 = vadd.f32 0.0, %v223
    %v225 = vpop.f32.mrb[0].mxu0
    %226 = vmatprep.mubr.f32.mxu0 0.0
    %227 = vmatmul.mubr.f32.gmra.mrb[0].mxu0 %v81
    %v228 = vpop.f32.mrb[0].mxu0
    %v229 = vadd.f32 0.0, %v228
    %v230 = vpop.f32.mrb[0].mxu0
    %231 = vmatprep.mubr.f32.mxu0 0.0
    %232 = vmatmul.mubr.f32.gmra.mrb[0].mxu0 %v84
    %v233 = vpop.f32.mrb[0].mxu0
    %v234 = vadd.f32 0.0, %v233
    %v235 = vpop.f32.mrb[0].mxu0
    %236 = vmatprep.mubr.f32.mxu0 0.0
    %237 = vmatmul.mubr.f32.gmra.mrb[0].mxu0 %v87
    %v238 = vpop.f32.mrb[0].mxu0
    %v239 = vadd.f32 0.0, %v238
    %v240 = vpop.f32.mrb[0].mxu0
    %241 = vmatprep.mubr.f32.mxu0 0.0
    %242 = vmatmul.mubr.f32.gmra.mrb[0].mxu0 %v90
    %v243 = vpop.f32.mrb[0].mxu0
    %v244 = vadd.f32 0.0, %v243
    %v245 = vpop.f32.mrb[0].mxu0
    %246 = vmatprep.mubr.f32.mxu0 0.0
    %247 = vmatmul.mubr.f32.gmra.mrb[0].mxu0 %v93
    %v248 = vpop.f32.mrb[0].mxu0
    %v249 = vadd.f32 0.0, %v248
    %v250 = vpop.f32.mrb[0].mxu0
    %251 = vmatprep.mubr.f32.mxu0 0.0
    %252 = vmatmul.mubr.f32.gmra.mrb[0].mxu0 %v96
    %v253 = vpop.f32.mrb[0].mxu0
    %v254 = vadd.f32 0.0, %v253
    %v255 = vpop.f32.mrb[0].mxu0
    %256 = vmatprep.mubr.f32.mxu0 0.0
    %257 = vmatmul.mubr.f32.gmra.mrb[0].mxu0 %v99
    %v258 = vpop.f32.mrb[0].mxu0
    %v259 = vadd.f32 0.0, %v258
    %v260 = vpop.f32.mrb[0].mxu0
    %261 = vmatprep.mubr.f32.mxu0 0.0
    %262 = vmatmul.mubr.f32.gmra.mrb[0].mxu0 %v102
    %v263 = vpop.f32.mrb[0].mxu0
    %v264 = vadd.f32 0.0, %v263
    %v265 = vpop.f32.mrb[0].mxu0
    %266 = vmatprep.mubr.f32.mxu0 0.0
    %267 = vmatmul.mubr.f32.gmra.mrb[0].mxu0 %v105
    %v268 = vpop.f32.mrb[0].mxu0
    %v269 = vadd.f32 0.0, %v268
    %v270 = vpop.f32.mrb[0].mxu0
    %271 = vmatprep.mubr.f32.mxu0 0.0
    %272 = vmatmul.mubr.f32.gmra.mrb[0].mxu0 %v108
    %v273 = vpop.f32.mrb[0].mxu0
    %v274 = vadd.f32 0.0, %v273
    %v275 = vpop.f32.mrb[0].mxu0
    %276 = vmatprep.mubr.f32.mxu0 0.0
    %277 = vmatmul.mubr.f32.gmra.mrb[0].mxu0 %v111
    %v278 = vpop.f32.mrb[0].mxu0
    %v279 = vadd.f32 0.0, %v278
    %v280 = vpop.f32.mrb[0].mxu0
    %281 = vmatprep.mubr.f32.mxu0 0.0
    %282 = vmatmul.mubr.f32.gmra.mrb[0].mxu0 %v114
    %v283 = vpop.f32.mrb[0].mxu0
    %v284 = vadd.f32 0.0, %v283
    %v285 = vpop.f32.mrb[0].mxu0
    %286 = vmatprep.mubr.f32.mxu0 0.0
    %287 = vmatmul.mubr.f32.gmra.mrb[0].mxu0 %v117
    %v288 = vpop.f32.mrb[0].mxu0
    %v289 = vadd.f32 0.0, %v288
    %v290 = vpop.f32.mrb[0].mxu0
    %291 = vmatprep.mubr.f32.mxu0 0.0
    %292 = vmatmul.mubr.f32.gmra.mrb[0].mxu0 %v120
    %v293 = vpop.f32.mrb[0].mxu0
    %v294 = vadd.f32 0.0, %v293
    %v295 = vpop.f32.mrb[0].mxu0
    %296 = vmatprep.mubr.f32.mxu0 0.0
    %297 = vmatmul.mubr.f32.gmra.mrb[0].mxu0 %v123
    %v298 = vpop.f32.mrb[0].mxu0
    %v299 = vadd.f32 0.0, %v298
    %v300 = vpop.f32.mrb[0].mxu0
    %301 = vmatprep.mubr.f32.mxu0 0.0
    %302 = vmatmul.mubr.f32.gmra.mrb[0].mxu0 %v126
    %v303 = vpop.f32.mrb[0].mxu0
    %v304 = vadd.f32 0.0, %v303
    %v305 = vpop.f32.mrb[0].mxu0
    %306 = vmatprep.mubr.f32.mxu0 0.0
    %307 = vmatmul.mubr.f32.gmra.mrb[0].mxu0 %v129
    %v308 = vpop.f32.mrb[0].mxu0
    %v309 = vadd.f32 0.0, %v308
    %v310 = vpop.f32.mrb[0].mxu0
    %311 = vmatprep.mubr.f32.mxu0 0.0
    %312 = vmatmul.mubr.f32.gmra.mrb[0].mxu0 %v132
    %v313 = vpop.f32.mrb[0].mxu0
    %v314 = vadd.f32 0.0, %v313
    %v315 = vpop.f32.mrb[0].mxu0
    %316 = vmatprep.mubr.f32.mxu0 0.0
    %317 = vmatmul.mubr.f32.gmra.mrb[0].mxu0 %v135
    %v318 = vpop.f32.mrb[0].mxu0
    %v319 = vadd.f32 0.0, %v318
    %v320 = vpop.f32.mrb[0].mxu0
    %321 = vmatprep.mubr.f32.mxu0 0.0
    %322 = vmatmul.mubr.f32.gmra.mrb[0].mxu0 %v138
    %v323 = vpop.f32.mrb[0].mxu0
    %v324 = vadd.f32 0.0, %v323
    %v325 = vpop.f32.mrb[0].mxu0
    %326 = vmatprep.mubr.f32.mxu0 0.0
    %327 = vmatmul.mubr.f32.gmra.mrb[0].mxu0 %v141
    %v328 = vpop.f32.mrb[0].mxu0
    %v329 = vadd.f32 0.0, %v328
    %v330 = vpop.f32.mrb[0].mxu0
    %331 = vdwg.mxu0
    %v333 = vsel %vm70, %v33, 0
    %v336 = vsel %vm70, %v49, 0
    %v339 = vsel %vm143, %v65, 0
    %341 = vmatprep.subr.mxu0 0.0
    %342 = vmatpush1.msra.mxu0 %v339
    %343 = vmatprep.subr.mxu0 0.0
    %344 = vmatpush1.msra.mxu0 0.0
    %345 = vmatprep.subr.mxu0 0.0
    %346 = vmatpush1.msra.mxu0 0.0
    %347 = vmatprep.subr.mxu0 0.0
    %348 = vmatpush1.msra.mxu0 0.0
    %349 = vmatprep.subr.mxu0 0.0
    %350 = vmatpush1.msra.mxu0 0.0
    %351 = vmatprep.subr.mxu0 0.0
    %352 = vmatpush1.msra.mxu0 0.0
    %353 = vmatprep.subr.mxu0 0.0
    %354 = vmatpush1.msra.mxu0 0.0
    %355 = vmatprep.subr.mxu0 0.0
    %356 = vmatpush1.msra.mxu0 0.0
    %357 = vmatprep.subr.mxu0 0.0
    %358 = vmatpush1.msra.mxu0 0.0
    %359 = vmatprep.subr.mxu0 0.0
    %360 = vmatpush1.msra.mxu0 0.0
    %361 = vmatprep.subr.mxu0 0.0
    %362 = vmatpush1.msra.mxu0 0.0
    %363 = vmatprep.subr.mxu0 0.0
    %364 = vmatpush1.msra.mxu0 0.0
    %365 = vmatprep.subr.mxu0 0.0
    %366 = vmatpush1.msra.mxu0 0.0
    %367 = vmatprep.subr.mxu0 0.0
    %368 = vmatpush1.msra.mxu0 0.0
    %369 = vmatprep.subr.mxu0 0.0
    %370 = vmatpush1.msra.mxu0 0.0
    %371 = vmatprep.subr.mxu0 0.0
    %372 = vmatpush1.msra.mxu0 0.0
    %373 = vmatprep.subr.mxu0 0.0
    %374 = vmatpush1.msra.mxu0 0.0
    %375 = vmatprep.subr.mxu0 0.0
    %376 = vmatpush1.msra.mxu0 0.0
    %377 = vmatprep.subr.mxu0 0.0
    %378 = vmatpush1.msra.mxu0 0.0
    %379 = vmatprep.subr.mxu0 0.0
    %380 = vmatpush1.msra.mxu0 0.0
    %381 = vmatprep.subr.mxu0 0.0
    %382 = vmatpush1.msra.mxu0 0.0
    %383 = vmatprep.subr.mxu0 0.0
    %384 = vmatpush1.msra.mxu0 0.0
    %385 = vmatprep.subr.mxu0 0.0
    %386 = vmatpush1.msra.mxu0 0.0
    %387 = vmatprep.subr.mxu0 0.0
    %388 = vmatpush1.msra.mxu0 0.0
    %389 = vmatprep.subr.mxu0 0.0
    %390 = vmatpush1.msra.mxu0 0.0
    %391 = vmatprep.subr.mxu0 0.0
    %392 = vmatpush1.msra.mxu0 0.0
    %393 = vmatprep.subr.mxu0 0.0
    %394 = vmatpush1.msra.mxu0 0.0
    %395 = vmatprep.subr.mxu0 0.0
    %396 = vmatpush1.msra.mxu0 0.0
    %397 = vmatprep.subr.mxu0 0.0
    %398 = vmatpush1.msra.mxu0 0.0
    %399 = vmatprep.subr.mxu0 0.0
    %400 = vmatpush1.msra.mxu0 0.0
    %401 = vmatprep.subr.mxu0 0.0
    %402 = vmatpush1.msra.mxu0 0.0
    %403 = vmatprep.subr.mxu0 0.0
    %404 = vmatpush1.msra.mxu0 0.0
    %405 = vmatprep.mubr.f32.mxu0 0.0
    %406 = vmatmul.mubr.f32.gmra.mrb[0].mxu0 %v333
    %v407 = vpop.f32.mrb[0].mxu0
    %v408 = vadd.f32 %v214, %v407
    %v409 = vpop.f32.mrb[0].mxu0
    %410 = vmatprep.mubr.f32.mxu0 0.0
    %411 = vmatmul.mubr.f32.gmra.mrb[0].mxu0 %v72
    %v412 = vpop.f32.mrb[0].mxu0
    %v413 = vadd.f32 %v219, %v412
    %v414 = vpop.f32.mrb[0].mxu0
    %415 = vmatprep.mubr.f32.mxu0 0.0
    %416 = vmatmul.mubr.f32.gmra.mrb[0].mxu0 %v75
    %v417 = vpop.f32.mrb[0].mxu0
    %v418 = vadd.f32 %v224, %v417
    %v419 = vpop.f32.mrb[0].mxu0
    %420 = vmatprep.mubr.f32.mxu0 0.0
    %421 = vmatmul.mubr.f32.gmra.mrb[0].mxu0 %v78
    %v422 = vpop.f32.mrb[0].mxu0
    %v423 = vadd.f32 %v229, %v422
    %v424 = vpop.f32.mrb[0].mxu0
    %425 = vmatprep.mubr.f32.mxu0 0.0
    %426 = vmatmul.mubr.f32.gmra.mrb[0].mxu0 %v81
    %v427 = vpop.f32.mrb[0].mxu0
    %v428 = vadd.f32 %v234, %v427
    %v429 = vpop.f32.mrb[0].mxu0
    %430 = vmatprep.mubr.f32.mxu0 0.0
    %431 = vmatmul.mubr.f32.gmra.mrb[0].mxu0 %v84
    %v432 = vpop.f32.mrb[0].mxu0
    %v433 = vadd.f32 %v239, %v432
    %v434 = vpop.f32.mrb[0].mxu0
    %435 = vmatprep.mubr.f32.mxu0 0.0
    %436 = vmatmul.mubr.f32.gmra.mrb[0].mxu0 %v87
    %v437 = vpop.f32.mrb[0].mxu0
    %v438 = vadd.f32 %v244, %v437
    %v439 = vpop.f32.mrb[0].mxu0
    %440 = vmatprep.mubr.f32.mxu0 0.0
    %441 = vmatmul.mubr.f32.gmra.mrb[0].mxu0 %v90
    %v442 = vpop.f32.mrb[0].mxu0
    %v443 = vadd.f32 %v249, %v442
    %v444 = vpop.f32.mrb[0].mxu0
    %445 = vmatprep.mubr.f32.mxu0 0.0
    %446 = vmatmul.mubr.f32.gmra.mrb[0].mxu0 %v93
    %v447 = vpop.f32.mrb[0].mxu0
    %v448 = vadd.f32 %v254, %v447
    %v449 = vpop.f32.mrb[0].mxu0
    %450 = vmatprep.mubr.f32.mxu0 0.0
    %451 = vmatmul.mubr.f32.gmra.mrb[0].mxu0 %v96
    %v452 = vpop.f32.mrb[0].mxu0
    %v453 = vadd.f32 %v259, %v452
    %v454 = vpop.f32.mrb[0].mxu0
    %455 = vmatprep.mubr.f32.mxu0 0.0
    %456 = vmatmul.mubr.f32.gmra.mrb[0].mxu0 %v99
    %v457 = vpop.f32.mrb[0].mxu0
    %v458 = vadd.f32 %v264, %v457
    %v459 = vpop.f32.mrb[0].mxu0
    %460 = vmatprep.mubr.f32.mxu0 0.0
    %461 = vmatmul.mubr.f32.gmra.mrb[0].mxu0 %v102
    %v462 = vpop.f32.mrb[0].mxu0
    %v463 = vadd.f32 %v269, %v462
    %v464 = vpop.f32.mrb[0].mxu0
    %465 = vmatprep.mubr.f32.mxu0 0.0
    %466 = vmatmul.mubr.f32.gmra.mrb[0].mxu0 %v336
    %v467 = vpop.f32.mrb[0].mxu0
    %v468 = vadd.f32 %v274, %v467
    %v469 = vpop.f32.mrb[0].mxu0
    %470 = vmatprep.mubr.f32.mxu0 0.0
    %471 = vmatmul.mubr.f32.gmra.mrb[0].mxu0 %v108
    %v472 = vpop.f32.mrb[0].mxu0
    %v473 = vadd.f32 %v279, %v472
    %v474 = vpop.f32.mrb[0].mxu0
    %475 = vmatprep.mubr.f32.mxu0 0.0
    %476 = vmatmul.mubr.f32.gmra.mrb[0].mxu0 %v111
    %v477 = vpop.f32.mrb[0].mxu0
    %v478 = vadd.f32 %v284, %v477
    %v479 = vpop.f32.mrb[0].mxu0
    %480 = vmatprep.mubr.f32.mxu0 0.0
    %481 = vmatmul.mubr.f32.gmra.mrb[0].mxu0 %v114
    %v482 = vpop.f32.mrb[0].mxu0
    %v483 = vadd.f32 %v289, %v482
    %v484 = vpop.f32.mrb[0].mxu0
    %485 = vmatprep.mubr.f32.mxu0 0.0
    %486 = vmatmul.mubr.f32.gmra.mrb[0].mxu0 %v117
    %v487 = vpop.f32.mrb[0].mxu0
    %v488 = vadd.f32 %v294, %v487
    %v489 = vpop.f32.mrb[0].mxu0
    %490 = vmatprep.mubr.f32.mxu0 0.0
    %491 = vmatmul.mubr.f32.gmra.mrb[0].mxu0 %v120
    %v492 = vpop.f32.mrb[0].mxu0
    %v493 = vadd.f32 %v299, %v492
    %v494 = vpop.f32.mrb[0].mxu0
    %495 = vmatprep.mubr.f32.mxu0 0.0
    %496 = vmatmul.mubr.f32.gmra.mrb[0].mxu0 %v123
    %v497 = vpop.f32.mrb[0].mxu0
    %v498 = vadd.f32 %v304, %v497
    %v499 = vpop.f32.mrb[0].mxu0
    %500 = vmatprep.mubr.f32.mxu0 0.0
    %501 = vmatmul.mubr.f32.gmra.mrb[0].mxu0 %v126
    %v502 = vpop.f32.mrb[0].mxu0
    %v503 = vadd.f32 %v309, %v502
    %v504 = vpop.f32.mrb[0].mxu0
    %505 = vmatprep.mubr.f32.mxu0 0.0
    %506 = vmatmul.mubr.f32.gmra.mrb[0].mxu0 %v129
    %v507 = vpop.f32.mrb[0].mxu0
    %v508 = vadd.f32 %v314, %v507
    %v509 = vpop.f32.mrb[0].mxu0
    %510 = vmatprep.mubr.f32.mxu0 0.0
    %511 = vmatmul.mubr.f32.gmra.mrb[0].mxu0 %v132
    %v512 = vpop.f32.mrb[0].mxu0
    %v513 = vadd.f32 %v319, %v512
    %v514 = vpop.f32.mrb[0].mxu0
    %515 = vmatprep.mubr.f32.mxu0 0.0
    %516 = vmatmul.mubr.f32.gmra.mrb[0].mxu0 %v135
    %v517 = vpop.f32.mrb[0].mxu0
    %v518 = vadd.f32 %v324, %v517
    %v519 = vpop.f32.mrb[0].mxu0
    %520 = vmatprep.mubr.f32.mxu0 0.0
    %521 = vmatmul.mubr.f32.gmra.mrb[0].mxu0 %v138
    %v522 = vpop.f32.mrb[0].mxu0
    %v523 = vadd.f32 %v329, %v522
    %v524 = vpop.f32.mrb[0].mxu0
    %525 = vdwg.mxu0
    %v527 = vsel %vm70, %v46, 0
    %v530 = vsel %vm70, %v62, 0
    %v533 = vsel %vm143, %v67, 0
    %535 = vmatprep.subr.mxu0 0.0
    %536 = vmatpush1.msra.mxu0 %v533
    %537 = vmatprep.subr.mxu0 0.0
    %538 = vmatpush1.msra.mxu0 0.0
    %539 = vmatprep.subr.mxu0 0.0
    %540 = vmatpush1.msra.mxu0 0.0
    %541 = vmatprep.subr.mxu0 0.0
    %542 = vmatpush1.msra.mxu0 0.0
    %543 = vmatprep.subr.mxu0 0.0
    %544 = vmatpush1.msra.mxu0 0.0
    %545 = vmatprep.subr.mxu0 0.0
    %546 = vmatpush1.msra.mxu0 0.0
    %547 = vmatprep.subr.mxu0 0.0
    %548 = vmatpush1.msra.mxu0 0.0
    %549 = vmatprep.subr.mxu0 0.0
    %550 = vmatpush1.msra.mxu0 0.0
    %551 = vmatprep.subr.mxu0 0.0
    %552 = vmatpush1.msra.mxu0 0.0
    %553 = vmatprep.subr.mxu0 0.0
    %554 = vmatpush1.msra.mxu0 0.0
    %555 = vmatprep.subr.mxu0 0.0
    %556 = vmatpush1.msra.mxu0 0.0
    %557 = vmatprep.subr.mxu0 0.0
    %558 = vmatpush1.msra.mxu0 0.0
    %559 = vmatprep.subr.mxu0 0.0
    %560 = vmatpush1.msra.mxu0 0.0
    %561 = vmatprep.subr.mxu0 0.0
    %562 = vmatpush1.msra.mxu0 0.0
    %563 = vmatprep.subr.mxu0 0.0
    %564 = vmatpush1.msra.mxu0 0.0
    %565 = vmatprep.subr.mxu0 0.0
    %566 = vmatpush1.msra.mxu0 0.0
    %567 = vmatprep.subr.mxu0 0.0
    %568 = vmatpush1.msra.mxu0 0.0
    %569 = vmatprep.subr.mxu0 0.0
    %570 = vmatpush1.msra.mxu0 0.0
    %571 = vmatprep.subr.mxu0 0.0
    %572 = vmatpush1.msra.mxu0 0.0
    %573 = vmatprep.subr.mxu0 0.0
    %574 = vmatpush1.msra.mxu0 0.0
    %575 = vmatprep.subr.mxu0 0.0
    %576 = vmatpush1.msra.mxu0 0.0
    %577 = vmatprep.subr.mxu0 0.0
    %578 = vmatpush1.msra.mxu0 0.0
    %579 = vmatprep.subr.mxu0 0.0
    %580 = vmatpush1.msra.mxu0 0.0
    %581 = vmatprep.subr.mxu0 0.0
    %582 = vmatpush1.msra.mxu0 0.0
    %583 = vmatprep.subr.mxu0 0.0
    %584 = vmatpush1.msra.mxu0 0.0
    %585 = vmatprep.subr.mxu0 0.0
    %586 = vmatpush1.msra.mxu0 0.0
    %587 = vmatprep.subr.mxu0 0.0
    %588 = vmatpush1.msra.mxu0 0.0
    %589 = vmatprep.subr.mxu0 0.0
    %590 = vmatpush1.msra.mxu0 0.0
    %591 = vmatprep.subr.mxu0 0.0
    %592 = vmatpush1.msra.mxu0 0.0
    %593 = vmatprep.subr.mxu0 0.0
    %594 = vmatpush1.msra.mxu0 0.0
    %595 = vmatprep.subr.mxu0 0.0
    %596 = vmatpush1.msra.mxu0 0.0
    %597 = vmatprep.subr.mxu0 0.0
    %598 = vmatpush1.msra.mxu0 0.0
    %599 = vmatprep.mubr.f32.mxu0 0.0
    %600 = vmatmul.mubr.f32.gmra.mrb[0].mxu0 %v75
    %v601 = vpop.f32.mrb[0].mxu0
    %v602 = vadd.f32 0.0, %v601
    %v603 = vpop.f32.mrb[0].mxu0
    %604 = vmatprep.mubr.f32.mxu0 0.0
    %605 = vmatmul.mubr.f32.gmra.mrb[0].mxu0 %v78
    %v606 = vpop.f32.mrb[0].mxu0
    %v607 = vadd.f32 0.0, %v606
    %v608 = vpop.f32.mrb[0].mxu0
    %609 = vmatprep.mubr.f32.mxu0 0.0
    %610 = vmatmul.mubr.f32.gmra.mrb[0].mxu0 %v81
    %v611 = vpop.f32.mrb[0].mxu0
    %v612 = vadd.f32 0.0, %v611
    %v613 = vpop.f32.mrb[0].mxu0
    %614 = vmatprep.mubr.f32.mxu0 0.0
    %615 = vmatmul.mubr.f32.gmra.mrb[0].mxu0 %v84
    %v616 = vpop.f32.mrb[0].mxu0
    %v617 = vadd.f32 0.0, %v616
    %v618 = vpop.f32.mrb[0].mxu0
    %619 = vmatprep.mubr.f32.mxu0 0.0
    %620 = vmatmul.mubr.f32.gmra.mrb[0].mxu0 %v87
    %v621 = vpop.f32.mrb[0].mxu0
    %v622 = vadd.f32 0.0, %v621
    %v623 = vpop.f32.mrb[0].mxu0
    %624 = vmatprep.mubr.f32.mxu0 0.0
    %625 = vmatmul.mubr.f32.gmra.mrb[0].mxu0 %v90
    %v626 = vpop.f32.mrb[0].mxu0
    %v627 = vadd.f32 0.0, %v626
    %v628 = vpop.f32.mrb[0].mxu0
    %629 = vmatprep.mubr.f32.mxu0 0.0
    %630 = vmatmul.mubr.f32.gmra.mrb[0].mxu0 %v93
    %v631 = vpop.f32.mrb[0].mxu0
    %v632 = vadd.f32 0.0, %v631
    %v633 = vpop.f32.mrb[0].mxu0
    %634 = vmatprep.mubr.f32.mxu0 0.0
    %635 = vmatmul.mubr.f32.gmra.mrb[0].mxu0 %v96
    %v636 = vpop.f32.mrb[0].mxu0
    %v637 = vadd.f32 0.0, %v636
    %v638 = vpop.f32.mrb[0].mxu0
    %639 = vmatprep.mubr.f32.mxu0 0.0
    %640 = vmatmul.mubr.f32.gmra.mrb[0].mxu0 %v99
    %v641 = vpop.f32.mrb[0].mxu0
    %v642 = vadd.f32 0.0, %v641
    %v643 = vpop.f32.mrb[0].mxu0
    %644 = vmatprep.mubr.f32.mxu0 0.0
    %645 = vmatmul.mubr.f32.gmra.mrb[0].mxu0 %v102
    %v646 = vpop.f32.mrb[0].mxu0
    %v647 = vadd.f32 0.0, %v646
    %v648 = vpop.f32.mrb[0].mxu0
    %649 = vmatprep.mubr.f32.mxu0 0.0
    %650 = vmatmul.mubr.f32.gmra.mrb[0].mxu0 %v105
    %v651 = vpop.f32.mrb[0].mxu0
    %v652 = vadd.f32 0.0, %v651
    %v653 = vpop.f32.mrb[0].mxu0
    %654 = vmatprep.mubr.f32.mxu0 0.0
    %655 = vmatmul.mubr.f32.gmra.mrb[0].mxu0 %v527
    %v656 = vpop.f32.mrb[0].mxu0
    %v657 = vadd.f32 0.0, %v656
    %v658 = vpop.f32.mrb[0].mxu0
    %659 = vmatprep.mubr.f32.mxu0 0.0
    %660 = vmatmul.mubr.f32.gmra.mrb[0].mxu0 %v111
    %v661 = vpop.f32.mrb[0].mxu0
    %v662 = vadd.f32 0.0, %v661
    %v663 = vpop.f32.mrb[0].mxu0
    %664 = vmatprep.mubr.f32.mxu0 0.0
    %665 = vmatmul.mubr.f32.gmra.mrb[0].mxu0 %v114
    %v666 = vpop.f32.mrb[0].mxu0
    %v667 = vadd.f32 0.0, %v666
    %v668 = vpop.f32.mrb[0].mxu0
    %669 = vmatprep.mubr.f32.mxu0 0.0
    %670 = vmatmul.mubr.f32.gmra.mrb[0].mxu0 %v117
    %v671 = vpop.f32.mrb[0].mxu0
    %v672 = vadd.f32 0.0, %v671
    %v673 = vpop.f32.mrb[0].mxu0
    %674 = vmatprep.mubr.f32.mxu0 0.0
    %675 = vmatmul.mubr.f32.gmra.mrb[0].mxu0 %v120
    %v676 = vpop.f32.mrb[0].mxu0
    %v677 = vadd.f32 0.0, %v676
    %v678 = vpop.f32.mrb[0].mxu0
    %679 = vmatprep.mubr.f32.mxu0 0.0
    %680 = vmatmul.mubr.f32.gmra.mrb[0].mxu0 %v123
    %v681 = vpop.f32.mrb[0].mxu0
    %v682 = vadd.f32 0.0, %v681
    %v683 = vpop.f32.mrb[0].mxu0
    %684 = vmatprep.mubr.f32.mxu0 0.0
    %685 = vmatmul.mubr.f32.gmra.mrb[0].mxu0 %v126
    %v686 = vpop.f32.mrb[0].mxu0
    %v687 = vadd.f32 0.0, %v686
    %v688 = vpop.f32.mrb[0].mxu0
    %689 = vmatprep.mubr.f32.mxu0 0.0
    %690 = vmatmul.mubr.f32.gmra.mrb[0].mxu0 %v129
    %v691 = vpop.f32.mrb[0].mxu0
    %v692 = vadd.f32 0.0, %v691
    %v693 = vpop.f32.mrb[0].mxu0
    %694 = vmatprep.mubr.f32.mxu0 0.0
    %695 = vmatmul.mubr.f32.gmra.mrb[0].mxu0 %v132
    %v696 = vpop.f32.mrb[0].mxu0
    %v697 = vadd.f32 0.0, %v696
    %v698 = vpop.f32.mrb[0].mxu0
    %699 = vmatprep.mubr.f32.mxu0 0.0
    %700 = vmatmul.mubr.f32.gmra.mrb[0].mxu0 %v135
    %v701 = vpop.f32.mrb[0].mxu0
    %v702 = vadd.f32 0.0, %v701
    %v703 = vpop.f32.mrb[0].mxu0
    %704 = vmatprep.mubr.f32.mxu0 0.0
    %705 = vmatmul.mubr.f32.gmra.mrb[0].mxu0 %v138
    %v706 = vpop.f32.mrb[0].mxu0
    %v707 = vadd.f32 0.0, %v706
    %v708 = vpop.f32.mrb[0].mxu0
    %709 = vmatprep.mubr.f32.mxu0 0.0
    %710 = vmatmul.mubr.f32.gmra.mrb[0].mxu0 %v141
    %v711 = vpop.f32.mrb[0].mxu0
    %v712 = vadd.f32 0.0, %v711
    %v713 = vpop.f32.mrb[0].mxu0
    %714 = vmatprep.mubr.f32.mxu0 0.0
    %715 = vmatmul.mubr.f32.gmra.mrb[0].mxu0 %v530
    %v716 = vpop.f32.mrb[0].mxu0
    %v717 = vadd.f32 0.0, %v716
    %v718 = vpop.f32.mrb[0].mxu0
    %719 = vdwg.mxu0
    %v720 = vadd.f32 %v408, %v602
    %v721 = vadd.f32 %v413, %v607
    %v722 = vadd.f32 %v418, %v612
    %v723 = vadd.f32 %v423, %v617
    %v724 = vadd.f32 %v428, %v622
    %v725 = vadd.f32 %v433, %v627
    %v726 = vadd.f32 %v438, %v632
    %v727 = vadd.f32 %v443, %v637
    %v728 = vadd.f32 %v448, %v642
    %v729 = vadd.f32 %v453, %v647
    %v730 = vadd.f32 %v458, %v652
    %v731 = vadd.f32 %v463, %v657
    %v732 = vadd.f32 %v468, %v662
    %v733 = vadd.f32 %v473, %v667
    %v734 = vadd.f32 %v478, %v672
    %v735 = vadd.f32 %v483, %v677
    %v736 = vadd.f32 %v488, %v682
    %v737 = vadd.f32 %v493, %v687
    %v738 = vadd.f32 %v498, %v692
    %v739 = vadd.f32 %v503, %v697
    %v740 = vadd.f32 %v508, %v702
    %v741 = vadd.f32 %v513, %v707
    %v742 = vadd.f32 %v518, %v712
    %v743 = vadd.f32 %v523, %v717
    %v745 = vsel %vm70, %v47, 0
    %v748 = vsel %vm70, %v63, 0
    %v751 = vsel %vm143, %v68, 0
    %753 = vmatprep.subr.mxu0 0.0
    %754 = vmatpush1.msra.mxu0 %v751
    %755 = vmatprep.subr.mxu0 0.0
    %756 = vmatpush1.msra.mxu0 0.0
    %757 = vmatprep.subr.mxu0 0.0
    %758 = vmatpush1.msra.mxu0 0.0
    %759 = vmatprep.subr.mxu0 0.0
    %760 = vmatpush1.msra.mxu0 0.0
    %761 = vmatprep.subr.mxu0 0.0
    %762 = vmatpush1.msra.mxu0 0.0
    %763 = vmatprep.subr.mxu0 0.0
    %764 = vmatpush1.msra.mxu0 0.0
    %765 = vmatprep.subr.mxu0 0.0
    %766 = vmatpush1.msra.mxu0 0.0
    %767 = vmatprep.subr.mxu0 0.0
    %768 = vmatpush1.msra.mxu0 0.0
    %769 = vmatprep.subr.mxu0 0.0
    %770 = vmatpush1.msra.mxu0 0.0
    %771 = vmatprep.subr.mxu0 0.0
    %772 = vmatpush1.msra.mxu0 0.0
    %773 = vmatprep.subr.mxu0 0.0
    %774 = vmatpush1.msra.mxu0 0.0
    %775 = vmatprep.subr.mxu0 0.0
    %776 = vmatpush1.msra.mxu0 0.0
    %777 = vmatprep.subr.mxu0 0.0
    %778 = vmatpush1.msra.mxu0 0.0
    %779 = vmatprep.subr.mxu0 0.0
    %780 = vmatpush1.msra.mxu0 0.0
    %781 = vmatprep.subr.mxu0 0.0
    %782 = vmatpush1.msra.mxu0 0.0
    %783 = vmatprep.subr.mxu0 0.0
    %784 = vmatpush1.msra.mxu0 0.0
    %785 = vmatprep.subr.mxu0 0.0
    %786 = vmatpush1.msra.mxu0 0.0
    %787 = vmatprep.subr.mxu0 0.0
    %788 = vmatpush1.msra.mxu0 0.0
    %789 = vmatprep.subr.mxu0 0.0
    %790 = vmatpush1.msra.mxu0 0.0
    %791 = vmatprep.subr.mxu0 0.0
    %792 = vmatpush1.msra.mxu0 0.0
    %793 = vmatprep.subr.mxu0 0.0
    %794 = vmatpush1.msra.mxu0 0.0
    %795 = vmatprep.subr.mxu0 0.0
    %796 = vmatpush1.msra.mxu0 0.0
    %797 = vmatprep.subr.mxu0 0.0
    %798 = vmatpush1.msra.mxu0 0.0
    %799 = vmatprep.subr.mxu0 0.0
    %800 = vmatpush1.msra.mxu0 0.0
    %801 = vmatprep.subr.mxu0 0.0
    %802 = vmatpush1.msra.mxu0 0.0
    %803 = vmatprep.subr.mxu0 0.0
    %804 = vmatpush1.msra.mxu0 0.0
    %805 = vmatprep.subr.mxu0 0.0
    %806 = vmatpush1.msra.mxu0 0.0
    %807 = vmatprep.subr.mxu0 0.0
    %808 = vmatpush1.msra.mxu0 0.0
    %809 = vmatprep.subr.mxu0 0.0
    %810 = vmatpush1.msra.mxu0 0.0
    %811 = vmatprep.subr.mxu0 0.0
    %812 = vmatpush1.msra.mxu0 0.0
    %813 = vmatprep.subr.mxu0 0.0
    %814 = vmatpush1.msra.mxu0 0.0
    %815 = vmatprep.subr.mxu0 0.0
    %816 = vmatpush1.msra.mxu0 0.0
    %817 = vmatprep.mubr.f32.mxu0 0.0
    %818 = vmatmul.mubr.f32.gmra.mrb[0].mxu0 %v78
    %v819 = vpop.f32.mrb[0].mxu0
    %v820 = vadd.f32 0.0, %v819
    %v821 = vpop.f32.mrb[0].mxu0
    %822 = vmatprep.mubr.f32.mxu0 0.0
    %823 = vmatmul.mubr.f32.gmra.mrb[0].mxu0 %v81
    %v824 = vpop.f32.mrb[0].mxu0
    %v825 = vadd.f32 0.0, %v824
    %v826 = vpop.f32.mrb[0].mxu0
    %827 = vmatprep.mubr.f32.mxu0 0.0
    %828 = vmatmul.mubr.f32.gmra.mrb[0].mxu0 %v84
    %v829 = vpop.f32.mrb[0].mxu0
    %v830 = vadd.f32 0.0, %v829
    %v831 = vpop.f32.mrb[0].mxu0
    %832 = vmatprep.mubr.f32.mxu0 0.0
    %833 = vmatmul.mubr.f32.gmra.mrb[0].mxu0 %v87
    %v834 = vpop.f32.mrb[0].mxu0
    %v835 = vadd.f32 0.0, %v834
    %v836 = vpop.f32.mrb[0].mxu0
    %837 = vmatprep.mubr.f32.mxu0 0.0
    %838 = vmatmul.mubr.f32.gmra.mrb[0].mxu0 %v90
    %v839 = vpop.f32.mrb[0].mxu0
    %v840 = vadd.f32 0.0, %v839
    %v841 = vpop.f32.mrb[0].mxu0
    %842 = vmatprep.mubr.f32.mxu0 0.0
    %843 = vmatmul.mubr.f32.gmra.mrb[0].mxu0 %v93
    %v844 = vpop.f32.mrb[0].mxu0
    %v845 = vadd.f32 0.0, %v844
    %v846 = vpop.f32.mrb[0].mxu0
    %847 = vmatprep.mubr.f32.mxu0 0.0
    %848 = vmatmul.mubr.f32.gmra.mrb[0].mxu0 %v96
    %v849 = vpop.f32.mrb[0].mxu0
    %v850 = vadd.f32 0.0, %v849
    %v851 = vpop.f32.mrb[0].mxu0
    %852 = vmatprep.mubr.f32.mxu0 0.0
    %853 = vmatmul.mubr.f32.gmra.mrb[0].mxu0 %v99
    %v854 = vpop.f32.mrb[0].mxu0
    %v855 = vadd.f32 0.0, %v854
    %v856 = vpop.f32.mrb[0].mxu0
    %857 = vmatprep.mubr.f32.mxu0 0.0
    %858 = vmatmul.mubr.f32.gmra.mrb[0].mxu0 %v102
    %v859 = vpop.f32.mrb[0].mxu0
    %v860 = vadd.f32 0.0, %v859
    %v861 = vpop.f32.mrb[0].mxu0
    %862 = vmatprep.mubr.f32.mxu0 0.0
    %863 = vmatmul.mubr.f32.gmra.mrb[0].mxu0 %v105
    %v864 = vpop.f32.mrb[0].mxu0
    %v865 = vadd.f32 0.0, %v864
    %v866 = vpop.f32.mrb[0].mxu0
    %867 = vmatprep.mubr.f32.mxu0 0.0
    %868 = vmatmul.mubr.f32.gmra.mrb[0].mxu0 %v527
    %v869 = vpop.f32.mrb[0].mxu0
    %v870 = vadd.f32 0.0, %v869
    %v871 = vpop.f32.mrb[0].mxu0
    %872 = vmatprep.mubr.f32.mxu0 0.0
    %873 = vmatmul.mubr.f32.gmra.mrb[0].mxu0 %v745
    %v874 = vpop.f32.mrb[0].mxu0
    %v875 = vadd.f32 0.0, %v874
    %v876 = vpop.f32.mrb[0].mxu0
    %877 = vmatprep.mubr.f32.mxu0 0.0
    %878 = vmatmul.mubr.f32.gmra.mrb[0].mxu0 %v114
    %v879 = vpop.f32.mrb[0].mxu0
    %v880 = vadd.f32 0.0, %v879
    %v881 = vpop.f32.mrb[0].mxu0
    %882 = vmatprep.mubr.f32.mxu0 0.0
    %883 = vmatmul.mubr.f32.gmra.mrb[0].mxu0 %v117
    %v884 = vpop.f32.mrb[0].mxu0
    %v885 = vadd.f32 0.0, %v884
    %v886 = vpop.f32.mrb[0].mxu0
    %887 = vmatprep.mubr.f32.mxu0 0.0
    %888 = vmatmul.mubr.f32.gmra.mrb[0].mxu0 %v120
    %v889 = vpop.f32.mrb[0].mxu0
    %v890 = vadd.f32 0.0, %v889
    %v891 = vpop.f32.mrb[0].mxu0
    %892 = vmatprep.mubr.f32.mxu0 0.0
    %893 = vmatmul.mubr.f32.gmra.mrb[0].mxu0 %v123
    %v894 = vpop.f32.mrb[0].mxu0
    %v895 = vadd.f32 0.0, %v894
    %v896 = vpop.f32.mrb[0].mxu0
    %897 = vmatprep.mubr.f32.mxu0 0.0
    %898 = vmatmul.mubr.f32.gmra.mrb[0].mxu0 %v126
    %v899 = vpop.f32.mrb[0].mxu0
    %v900 = vadd.f32 0.0, %v899
    %v901 = vpop.f32.mrb[0].mxu0
    %902 = vmatprep.mubr.f32.mxu0 0.0
    %903 = vmatmul.mubr.f32.gmra.mrb[0].mxu0 %v129
    %v904 = vpop.f32.mrb[0].mxu0
    %v905 = vadd.f32 0.0, %v904
    %v906 = vpop.f32.mrb[0].mxu0
    %907 = vmatprep.mubr.f32.mxu0 0.0
    %908 = vmatmul.mubr.f32.gmra.mrb[0].mxu0 %v132
    %v909 = vpop.f32.mrb[0].mxu0
    %v910 = vadd.f32 0.0, %v909
    %v911 = vpop.f32.mrb[0].mxu0
    %912 = vmatprep.mubr.f32.mxu0 0.0
    %913 = vmatmul.mubr.f32.gmra.mrb[0].mxu0 %v135
    %v914 = vpop.f32.mrb[0].mxu0
    %v915 = vadd.f32 0.0, %v914
    %v916 = vpop.f32.mrb[0].mxu0
    %917 = vmatprep.mubr.f32.mxu0 0.0
    %918 = vmatmul.mubr.f32.gmra.mrb[0].mxu0 %v138
    %v919 = vpop.f32.mrb[0].mxu0
    %v920 = vadd.f32 0.0, %v919
    %v921 = vpop.f32.mrb[0].mxu0
    %922 = vmatprep.mubr.f32.mxu0 0.0
    %923 = vmatmul.mubr.f32.gmra.mrb[0].mxu0 %v141
    %v924 = vpop.f32.mrb[0].mxu0
    %v925 = vadd.f32 0.0, %v924
    %v926 = vpop.f32.mrb[0].mxu0
    %927 = vmatprep.mubr.f32.mxu0 0.0
    %928 = vmatmul.mubr.f32.gmra.mrb[0].mxu0 %v530
    %v929 = vpop.f32.mrb[0].mxu0
    %v930 = vadd.f32 0.0, %v929
    %v931 = vpop.f32.mrb[0].mxu0
    %932 = vmatprep.mubr.f32.mxu0 0.0
    %933 = vmatmul.mubr.f32.gmra.mrb[0].mxu0 %v748
    %v934 = vpop.f32.mrb[0].mxu0
    %v935 = vadd.f32 0.0, %v934
    %v936 = vpop.f32.mrb[0].mxu0
    %937 = vdwg.mxu0
    %v938 = vadd.f32 %v720, %v820
    %v939 = vadd.f32 %v721, %v825
    %v940 = vadd.f32 %v722, %v830
    %v941 = vadd.f32 %v723, %v835
    %v942 = vadd.f32 %v724, %v840
    %v943 = vadd.f32 %v725, %v845
    %v944 = vadd.f32 %v726, %v850
    %v945 = vadd.f32 %v727, %v855
    %v946 = vadd.f32 %v728, %v860
    %v947 = vadd.f32 %v729, %v865
    %v948 = vadd.f32 %v730, %v870
    %v949 = vadd.f32 %v731, %v875
    %v950 = vadd.f32 %v732, %v880
    %v951 = vadd.f32 %v733, %v885
    %v952 = vadd.f32 %v734, %v890
    %v953 = vadd.f32 %v735, %v895
    %v954 = vadd.f32 %v736, %v900
    %v955 = vadd.f32 %v737, %v905
    %v956 = vadd.f32 %v738, %v910
    %v957 = vadd.f32 %v739, %v915
    %v958 = vadd.f32 %v740, %v920
    %v959 = vadd.f32 %v741, %v925
    %v960 = vadd.f32 %v742, %v930
    %v961 = vadd.f32 %v743, %v935
    %v963 = vsel %vm70, %v48, 0
    %v966 = vsel %vm70, %v64, 0
    %v969 = vsel %vm143, %v69, 0
    %971 = vmatprep.subr.mxu0 0.0
    %972 = vmatpush1.msra.mxu0 %v969
    %973 = vmatprep.subr.mxu0 0.0
    %974 = vmatpush1.msra.mxu0 0.0
    %975 = vmatprep.subr.mxu0 0.0
    %976 = vmatpush1.msra.mxu0 0.0
    %977 = vmatprep.subr.mxu0 0.0
    %978 = vmatpush1.msra.mxu0 0.0
    %979 = vmatprep.subr.mxu0 0.0
    %980 = vmatpush1.msra.mxu0 0.0
    %981 = vmatprep.subr.mxu0 0.0
    %982 = vmatpush1.msra.mxu0 0.0
    %983 = vmatprep.subr.mxu0 0.0
    %984 = vmatpush1.msra.mxu0 0.0
    %985 = vmatprep.subr.mxu0 0.0
    %986 = vmatpush1.msra.mxu0 0.0
    %987 = vmatprep.subr.mxu0 0.0
    %988 = vmatpush1.msra.mxu0 0.0
    %989 = vmatprep.subr.mxu0 0.0
    %990 = vmatpush1.msra.mxu0 0.0
    %991 = vmatprep.subr.mxu0 0.0
    %992 = vmatpush1.msra.mxu0 0.0
    %993 = vmatprep.subr.mxu0 0.0
    %994 = vmatpush1.msra.mxu0 0.0
    %995 = vmatprep.subr.mxu0 0.0
    %996 = vmatpush1.msra.mxu0 0.0
    %997 = vmatprep.subr.mxu0 0.0
    %998 = vmatpush1.msra.mxu0 0.0
    %999 = vmatprep.subr.mxu0 0.0
    %1000 = vmatpush1.msra.mxu0 0.0
    %1001 = vmatprep.subr.mxu0 0.0
    %1002 = vmatpush1.msra.mxu0 0.0
    %1003 = vmatprep.subr.mxu0 0.0
    %1004 = vmatpush1.msra.mxu0 0.0
    %1005 = vmatprep.subr.mxu0 0.0
    %1006 = vmatpush1.msra.mxu0 0.0
    %1007 = vmatprep.subr.mxu0 0.0
    %1008 = vmatpush1.msra.mxu0 0.0
    %1009 = vmatprep.subr.mxu0 0.0
    %1010 = vmatpush1.msra.mxu0 0.0
    %1011 = vmatprep.subr.mxu0 0.0
    %1012 = vmatpush1.msra.mxu0 0.0
    %1013 = vmatprep.subr.mxu0 0.0
    %1014 = vmatpush1.msra.mxu0 0.0
    %1015 = vmatprep.subr.mxu0 0.0
    %1016 = vmatpush1.msra.mxu0 0.0
    %1017 = vmatprep.subr.mxu0 0.0
    %1018 = vmatpush1.msra.mxu0 0.0
    %1019 = vmatprep.subr.mxu0 0.0
    %1020 = vmatpush1.msra.mxu0 0.0
    %1021 = vmatprep.subr.mxu0 0.0
    %1022 = vmatpush1.msra.mxu0 0.0
    %1023 = vmatprep.subr.mxu0 0.0
    %1024 = vmatpush1.msra.mxu0 0.0
    %1025 = vmatprep.subr.mxu0 0.0
    %1026 = vmatpush1.msra.mxu0 0.0
    %1027 = vmatprep.subr.mxu0 0.0
    %1028 = vmatpush1.msra.mxu0 0.0
    %1029 = vmatprep.subr.mxu0 0.0
    %1030 = vmatpush1.msra.mxu0 0.0
    %1031 = vmatprep.subr.mxu0 0.0
    %1032 = vmatpush1.msra.mxu0 0.0
    %1033 = vmatprep.subr.mxu0 0.0
    %1034 = vmatpush1.msra.mxu0 0.0
    %1035 = vmatprep.mubr.f32.mxu0 0.0
    %1036 = vmatmul.mubr.f32.gmra.mrb[0].mxu0 %v81
    %v1037 = vpop.f32.mrb[0].mxu0
    %v1038 = vadd.f32 0.0, %v1037
    %v1039 = vpop.f32.mrb[0].mxu0
    %1040 = vmatprep.mubr.f32.mxu0 0.0
    %1041 = vmatmul.mubr.f32.gmra.mrb[0].mxu0 %v84
    %v1042 = vpop.f32.mrb[0].mxu0
    %v1043 = vadd.f32 0.0, %v1042
    %v1044 = vpop.f32.mrb[0].mxu0
    %1045 = vmatprep.mubr.f32.mxu0 0.0
    %1046 = vmatmul.mubr.f32.gmra.mrb[0].mxu0 %v87
    %v1047 = vpop.f32.mrb[0].mxu0
    %v1048 = vadd.f32 0.0, %v1047
    %v1049 = vpop.f32.mrb[0].mxu0
    %1050 = vmatprep.mubr.f32.mxu0 0.0
    %1051 = vmatmul.mubr.f32.gmra.mrb[0].mxu0 %v90
    %v1052 = vpop.f32.mrb[0].mxu0
    %v1053 = vadd.f32 0.0, %v1052
    %v1054 = vpop.f32.mrb[0].mxu0
    %1055 = vmatprep.mubr.f32.mxu0 0.0
    %1056 = vmatmul.mubr.f32.gmra.mrb[0].mxu0 %v93
    %v1057 = vpop.f32.mrb[0].mxu0
    %v1058 = vadd.f32 0.0, %v1057
    %v1059 = vpop.f32.mrb[0].mxu0
    %1060 = vmatprep.mubr.f32.mxu0 0.0
    %1061 = vmatmul.mubr.f32.gmra.mrb[0].mxu0 %v96
    %v1062 = vpop.f32.mrb[0].mxu0
    %v1063 = vadd.f32 0.0, %v1062
    %v1064 = vpop.f32.mrb[0].mxu0
    %1065 = vmatprep.mubr.f32.mxu0 0.0
    %1066 = vmatmul.mubr.f32.gmra.mrb[0].mxu0 %v99
    %v1067 = vpop.f32.mrb[0].mxu0
    %v1068 = vadd.f32 0.0, %v1067
    %v1069 = vpop.f32.mrb[0].mxu0
    %1070 = vmatprep.mubr.f32.mxu0 0.0
    %1071 = vmatmul.mubr.f32.gmra.mrb[0].mxu0 %v102
    %v1072 = vpop.f32.mrb[0].mxu0
    %v1073 = vadd.f32 0.0, %v1072
    %v1074 = vpop.f32.mrb[0].mxu0
    %1075 = vmatprep.mubr.f32.mxu0 0.0
    %1076 = vmatmul.mubr.f32.gmra.mrb[0].mxu0 %v105
    %v1077 = vpop.f32.mrb[0].mxu0
    %v1078 = vadd.f32 0.0, %v1077
    %v1079 = vpop.f32.mrb[0].mxu0
    %1080 = vmatprep.mubr.f32.mxu0 0.0
    %1081 = vmatmul.mubr.f32.gmra.mrb[0].mxu0 %v527
    %v1082 = vpop.f32.mrb[0].mxu0
    %v1083 = vadd.f32 0.0, %v1082
    %v1084 = vpop.f32.mrb[0].mxu0
    %1085 = vmatprep.mubr.f32.mxu0 0.0
    %1086 = vmatmul.mubr.f32.gmra.mrb[0].mxu0 %v745
    %v1087 = vpop.f32.mrb[0].mxu0
    %v1088 = vadd.f32 0.0, %v1087
    %v1089 = vpop.f32.mrb[0].mxu0
    %1090 = vmatprep.mubr.f32.mxu0 0.0
    %1091 = vmatmul.mubr.f32.gmra.mrb[0].mxu0 %v963
    %v1092 = vpop.f32.mrb[0].mxu0
    %v1093 = vadd.f32 0.0, %v1092
    %v1094 = vpop.f32.mrb[0].mxu0
    %1095 = vmatprep.mubr.f32.mxu0 0.0
    %1096 = vmatmul.mubr.f32.gmra.mrb[0].mxu0 %v117
    %v1097 = vpop.f32.mrb[0].mxu0
    %v1098 = vadd.f32 0.0, %v1097
    %v1099 = vpop.f32.mrb[0].mxu0
    %1100 = vmatprep.mubr.f32.mxu0 0.0
    %1101 = vmatmul.mubr.f32.gmra.mrb[0].mxu0 %v120
    %v1102 = vpop.f32.mrb[0].mxu0
    %v1103 = vadd.f32 0.0, %v1102
    %v1104 = vpop.f32.mrb[0].mxu0
    %1105 = vmatprep.mubr.f32.mxu0 0.0
    %1106 = vmatmul.mubr.f32.gmra.mrb[0].mxu0 %v123
    %v1107 = vpop.f32.mrb[0].mxu0
    %v1108 = vadd.f32 0.0, %v1107
    %v1109 = vpop.f32.mrb[0].mxu0
    %1110 = vmatprep.mubr.f32.mxu0 0.0
    %1111 = vmatmul.mubr.f32.gmra.mrb[0].mxu0 %v126
    %v1112 = vpop.f32.mrb[0].mxu0
    %v1113 = vadd.f32 0.0, %v1112
    %v1114 = vpop.f32.mrb[0].mxu0
    %1115 = vmatprep.mubr.f32.mxu0 0.0
    %1116 = vmatmul.mubr.f32.gmra.mrb[0].mxu0 %v129
    %v1117 = vpop.f32.mrb[0].mxu0
    %v1118 = vadd.f32 0.0, %v1117
    %v1119 = vpop.f32.mrb[0].mxu0
    %1120 = vmatprep.mubr.f32.mxu0 0.0
    %1121 = vmatmul.mubr.f32.gmra.mrb[0].mxu0 %v132
    %v1122 = vpop.f32.mrb[0].mxu0
    %v1123 = vadd.f32 0.0, %v1122
    %v1124 = vpop.f32.mrb[0].mxu0
    %1125 = vmatprep.mubr.f32.mxu0 0.0
    %1126 = vmatmul.mubr.f32.gmra.mrb[0].mxu0 %v135
    %v1127 = vpop.f32.mrb[0].mxu0
    %v1128 = vadd.f32 0.0, %v1127
    %v1129 = vpop.f32.mrb[0].mxu0
    %1130 = vmatprep.mubr.f32.mxu0 0.0
    %1131 = vmatmul.mubr.f32.gmra.mrb[0].mxu0 %v138
    %v1132 = vpop.f32.mrb[0].mxu0
    %v1133 = vadd.f32 0.0, %v1132
    %v1134 = vpop.f32.mrb[0].mxu0
    %1135 = vmatprep.mubr.f32.mxu0 0.0
    %1136 = vmatmul.mubr.f32.gmra.mrb[0].mxu0 %v141
    %v1137 = vpop.f32.mrb[0].mxu0
    %v1138 = vadd.f32 0.0, %v1137
    %v1139 = vpop.f32.mrb[0].mxu0
    %1140 = vmatprep.mubr.f32.mxu0 0.0
    %1141 = vmatmul.mubr.f32.gmra.mrb[0].mxu0 %v530
    %v1142 = vpop.f32.mrb[0].mxu0
    %v1143 = vadd.f32 0.0, %v1142
    %v1144 = vpop.f32.mrb[0].mxu0
    %1145 = vmatprep.mubr.f32.mxu0 0.0
    %1146 = vmatmul.mubr.f32.gmra.mrb[0].mxu0 %v748
    %v1147 = vpop.f32.mrb[0].mxu0
    %v1148 = vadd.f32 0.0, %v1147
    %v1149 = vpop.f32.mrb[0].mxu0
    %1150 = vmatprep.mubr.f32.mxu0 0.0
    %1151 = vmatmul.mubr.f32.gmra.mrb[0].mxu0 %v966
    %v1152 = vpop.f32.mrb[0].mxu0
    %v1153 = vadd.f32 0.0, %v1152
    %v1154 = vpop.f32.mrb[0].mxu0
    %1155 = vdwg.mxu0
    %v1156 = vadd.f32 %v938, %v1038
    %v1157 = vadd.f32 %v939, %v1043
    %v1158 = vadd.f32 %v940, %v1048
    %v1159 = vadd.f32 %v941, %v1053
    %v1160 = vadd.f32 %v942, %v1058
    %v1161 = vadd.f32 %v943, %v1063
    %v1162 = vadd.f32 %v944, %v1068
    %v1163 = vadd.f32 %v945, %v1073
    %v1164 = vadd.f32 %v946, %v1078
    %v1165 = vadd.f32 %v947, %v1083
    %v1166 = vadd.f32 %v948, %v1088
    %v1167 = vadd.f32 %v949, %v1093
    %v1168 = vadd.f32 %v950, %v1098
    %v1169 = vadd.f32 %v951, %v1103
    %v1170 = vadd.f32 %v952, %v1108
    %v1171 = vadd.f32 %v953, %v1113
    %v1172 = vadd.f32 %v954, %v1118
    %v1173 = vadd.f32 %v955, %v1123
    %v1174 = vadd.f32 %v956, %v1128
    %v1175 = vadd.f32 %v957, %v1133
    %v1176 = vadd.f32 %v958, %v1138
    %v1177 = vadd.f32 %v959, %v1143
    %v1178 = vadd.f32 %v960, %v1148
    %v1179 = vadd.f32 %v961, %v1153
    %v1180 = vld [vmem:[%s2] sm:$0x1]
    %v1182 = vlaneseq
    %v1183 = vshrl.u32 %v1182, 7
    %v1184 = vsub.s32 0, %v1183
    %v1185 = vrot.slane %v1180, %v1184
    %v1187 = vadd.f32 %v1156, %v1185
    %v1188 = vadd.f32 %v1157, %v1185
    %v1189 = vadd.f32 %v1158, %v1185
    %v1190 = vadd.f32 %v1159, %v1185
    %v1191 = vadd.f32 %v1160, %v1185
    %v1192 = vadd.f32 %v1161, %v1185
    %v1193 = vadd.f32 %v1162, %v1185
    %v1194 = vadd.f32 %v1163, %v1185
    %v1195 = vadd.f32 %v1164, %v1185
    %v1196 = vadd.f32 %v1165, %v1185
    %v1197 = vadd.f32 %v1166, %v1185
    %v1198 = vadd.f32 %v1167, %v1185
    %v1199 = vadd.f32 %v1168, %v1185
    %v1200 = vadd.f32 %v1169, %v1185
    %v1201 = vadd.f32 %v1170, %v1185
    %v1202 = vadd.f32 %v1171, %v1185
    %v1203 = vadd.f32 %v1172, %v1185
    %v1204 = vadd.f32 %v1173, %v1185
    %v1205 = vadd.f32 %v1174, %v1185
    %v1206 = vadd.f32 %v1175, %v1185
    %v1207 = vadd.f32 %v1176, %v1185
    %v1208 = vadd.f32 %v1177, %v1185
    %v1209 = vadd.f32 %v1178, %v1185
    %v1210 = vadd.f32 %v1179, %v1185
    %v1211 = vmax.f32 %v1187, 0.0
    %v1212 = vmax.f32 %v1188, 0.0
    %v1213 = vmax.f32 %v1189, 0.0
    %v1214 = vmax.f32 %v1190, 0.0
    %v1215 = vmax.f32 %v1191, 0.0
    %v1216 = vmax.f32 %v1192, 0.0
    %v1217 = vmax.f32 %v1193, 0.0
    %v1218 = vmax.f32 %v1194, 0.0
    %v1219 = vmax.f32 %v1195, 0.0
    %v1220 = vmax.f32 %v1196, 0.0
    %v1221 = vmax.f32 %v1197, 0.0
    %v1222 = vmax.f32 %v1198, 0.0
    %v1223 = vmax.f32 %v1199, 0.0
    %v1224 = vmax.f32 %v1200, 0.0
    %v1225 = vmax.f32 %v1201, 0.0
    %v1226 = vmax.f32 %v1202, 0.0
    %v1227 = vmax.f32 %v1203, 0.0
    %v1228 = vmax.f32 %v1204, 0.0
    %v1229 = vmax.f32 %v1205, 0.0
    %v1230 = vmax.f32 %v1206, 0.0
    %v1231 = vmax.f32 %v1207, 0.0
    %v1232 = vmax.f32 %v1208, 0.0
    %v1233 = vmax.f32 %v1209, 0.0
    %v1234 = vmax.f32 %v1210, 0.0
    %vm1235 = vcmask 64512
    %v1236 = vsel %vm1235, %v1211, 0.0
    %v1237 = vsel %vm1235, %v1212, 0.0
    %v1238 = vadd.f32 %v1236, %v1237
    %v1239 = vsel %vm1235, %v1213, 0.0
    %v1240 = vadd.f32 %v1238, %v1239
    %v1241 = vsel %vm1235, %v1214, 0.0
    %v1242 = vadd.f32 %v1240, %v1241
    %v1243 = vsel %vm1235, %v1215, 0.0
    %v1244 = vadd.f32 %v1242, %v1243
    %v1245 = vsel %vm1235, %v1216, 0.0
    %v1246 = vadd.f32 %v1244, %v1245
    %v1247 = vsel %vm1235, %v1217, 0.0
    %v1248 = vadd.f32 %v1246, %v1247
    %v1249 = vsel %vm1235, %v1218, 0.0
    %v1250 = vadd.f32 %v1248, %v1249
    %v1251 = vsel %vm1235, %v1219, 0.0
    %v1252 = vadd.f32 %v1250, %v1251
    %v1253 = vsel %vm1235, %v1220, 0.0
    %v1254 = vadd.f32 %v1252, %v1253
    %v1255 = vsel %vm1235, %v1221, 0.0
    %v1256 = vadd.f32 %v1254, %v1255
    %v1257 = vsel %vm1235, %v1222, 0.0
    %v1258 = vadd.f32 %v1256, %v1257
    %v1259 = vsel %vm1235, %v1223, 0.0
    %v1260 = vadd.f32 %v1258, %v1259
    %v1261 = vsel %vm1235, %v1224, 0.0
    %v1262 = vadd.f32 %v1260, %v1261
    %v1263 = vsel %vm1235, %v1225, 0.0
    %v1264 = vadd.f32 %v1262, %v1263
    %v1265 = vsel %vm1235, %v1226, 0.0
    %v1266 = vadd.f32 %v1264, %v1265
    %v1267 = vsel %vm1235, %v1227, 0.0
    %v1268 = vadd.f32 %v1266, %v1267
    %v1269 = vsel %vm1235, %v1228, 0.0
    %v1270 = vadd.f32 %v1268, %v1269
    %v1271 = vsel %vm1235, %v1229, 0.0
    %v1272 = vadd.f32 %v1270, %v1271
    %v1273 = vsel %vm1235, %v1230, 0.0
    %v1274 = vadd.f32 %v1272, %v1273
    %v1275 = vsel %vm1235, %v1231, 0.0
    %v1276 = vadd.f32 %v1274, %v1275
    %v1277 = vsel %vm1235, %v1232, 0.0
    %v1278 = vadd.f32 %v1276, %v1277
    %v1279 = vsel %vm1235, %v1233, 0.0
    %v1280 = vadd.f32 %v1278, %v1279
    %v1281 = vsel %vm1235, %v1234, 0.0
    %v1282 = vadd.f32 %v1280, %v1281
    %v1283 = vrot.slane %v1282, 4
    %v1284 = vadd.f32 %v1282, %v1283
    %v1285 = vrot.slane %v1284, 2
    %v1286 = vadd.f32 %v1284, %v1285
    %v1287 = vrot.slane %v1286, 1
    %v1288 = vadd.f32 %v1286, %v1287
    %v1289 = vrcp.pop 192.0
    %v1290 = vmul.f32 %v1288, %v1289
    %v1291 = vsub.f32 %v1211, %v1290
    %v1292 = vsub.f32 %v1212, %v1290
    %v1293 = vsub.f32 %v1213, %v1290
    %v1294 = vsub.f32 %v1214, %v1290
    %v1295 = vsub.f32 %v1215, %v1290
    %v1296 = vsub.f32 %v1216, %v1290
    %v1297 = vsub.f32 %v1217, %v1290
    %v1298 = vsub.f32 %v1218, %v1290
    %v1299 = vsub.f32 %v1219, %v1290
    %v1300 = vsub.f32 %v1220, %v1290
    %v1301 = vsub.f32 %v1221, %v1290
    %v1302 = vsub.f32 %v1222, %v1290
    %v1303 = vsub.f32 %v1223, %v1290
    %v1304 = vsub.f32 %v1224, %v1290
    %v1305 = vsub.f32 %v1225, %v1290
    %v1306 = vsub.f32 %v1226, %v1290
    %v1307 = vsub.f32 %v1227, %v1290
    %v1308 = vsub.f32 %v1228, %v1290
    %v1309 = vsub.f32 %v1229, %v1290
    %v1310 = vsub.f32 %v1230, %v1290
    %v1311 = vsub.f32 %v1231, %v1290
    %v1312 = vsub.f32 %v1232, %v1290
    %v1313 = vsub.f32 %v1233, %v1290
    %v1314 = vsub.f32 %v1234, %v1290
    %v1315 = vmul.f32 %v1291, %v1291
    %v1316 = vmul.f32 %v1292, %v1292
    %v1317 = vmul.f32 %v1293, %v1293
    %v1318 = vmul.f32 %v1294, %v1294
    %v1319 = vmul.f32 %v1295, %v1295
    %v1320 = vmul.f32 %v1296, %v1296
    %v1321 = vmul.f32 %v1297, %v1297
    %v1322 = vmul.f32 %v1298, %v1298
    %v1323 = vmul.f32 %v1299, %v1299
    %v1324 = vmul.f32 %v1300, %v1300
    %v1325 = vmul.f32 %v1301, %v1301
    %v1326 = vmul.f32 %v1302, %v1302
    %v1327 = vmul.f32 %v1303, %v1303
    %v1328 = vmul.f32 %v1304, %v1304
    %v1329 = vmul.f32 %v1305, %v1305
    %v1330 = vmul.f32 %v1306, %v1306
    %v1331 = vmul.f32 %v1307, %v1307
    %v1332 = vmul.f32 %v1308, %v1308
    %v1333 = vmul.f32 %v1309, %v1309
    %v1334 = vmul.f32 %v1310, %v1310
    %v1335 = vmul.f32 %v1311, %v1311
    %v1336 = vmul.f32 %v1312, %v1312
    %v1337 = vmul.f32 %v1313, %v1313
    %v1338 = vmul.f32 %v1314, %v1314
    %v1339 = vsel %vm1235, %v1315, 0.0
    %v1340 = vsel %vm1235, %v1316, 0.0
    %v1341 = vadd.f32 %v1339, %v1340
    %v1342 = vsel %vm1235, %v1317, 0.0
    %v1343 = vadd.f32 %v1341, %v1342
    %v1344 = vsel %vm1235, %v1318, 0.0
    %v1345 = vadd.f32 %v1343, %v1344
    %v1346 = vsel %vm1235, %v1319, 0.0
    %v1347 = vadd.f32 %v1345, %v1346
    %v1348 = vsel %vm1235, %v1320, 0.0
    %v1349 = vadd.f32 %v1347, %v1348
    %v1350 = vsel %vm1235, %v1321, 0.0
    %v1351 = vadd.f32 %v1349, %v1350
    %v1352 = vsel %vm1235, %v1322, 0.0
    %v1353 = vadd.f32 %v1351, %v1352
    %v1354 = vsel %vm1235, %v1323, 0.0
    %v1355 = vadd.f32 %v1353, %v1354
    %v1356 = vsel %vm1235, %v1324, 0.0
    %v1357 = vadd.f32 %v1355, %v1356
    %v1358 = vsel %vm1235, %v1325, 0.0
    %v1359 = vadd.f32 %v1357, %v1358
    %v1360 = vsel %vm1235, %v1326, 0.0
    %v1361 = vadd.f32 %v1359, %v1360
    %v1362 = vsel %vm1235, %v1327, 0.0
    %v1363 = vadd.f32 %v1361, %v1362
    %v1364 = vsel %vm1235, %v1328, 0.0
    %v1365 = vadd.f32 %v1363, %v1364
    %v1366 = vsel %vm1235, %v1329, 0.0
    %v1367 = vadd.f32 %v1365, %v1366
    %v1368 = vsel %vm1235, %v1330, 0.0
    %v1369 = vadd.f32 %v1367, %v1368
    %v1370 = vsel %vm1235, %v1331, 0.0
    %v1371 = vadd.f32 %v1369, %v1370
    %v1372 = vsel %vm1235, %v1332, 0.0
    %v1373 = vadd.f32 %v1371, %v1372
    %v1374 = vsel %vm1235, %v1333, 0.0
    %v1375 = vadd.f32 %v1373, %v1374
    %v1376 = vsel %vm1235, %v1334, 0.0
    %v1377 = vadd.f32 %v1375, %v1376
    %v1378 = vsel %vm1235, %v1335, 0.0
    %v1379 = vadd.f32 %v1377, %v1378
    %v1380 = vsel %vm1235, %v1336, 0.0
    %v1381 = vadd.f32 %v1379, %v1380
    %v1382 = vsel %vm1235, %v1337, 0.0
    %v1383 = vadd.f32 %v1381, %v1382
    %v1384 = vsel %vm1235, %v1338, 0.0
    %v1385 = vadd.f32 %v1383, %v1384
    %v1386 = vrot.slane %v1385, 4
    %v1387 = vadd.f32 %v1385, %v1386
    %v1388 = vrot.slane %v1387, 2
    %v1389 = vadd.f32 %v1387, %v1388
    %v1390 = vrot.slane %v1389, 1
    %v1391 = vadd.f32 %v1389, %v1390
    %v1392 = vmul.f32 %v1391, %v1289
    %v1393 = vadd.f32 %v1392, 1e-05
    %v1394 = vrsqrt.pop %v1393
    %v1395 = vmul.f32 %v1291, %v1394
    %v1396 = vmul.f32 %v1292, %v1394
    %v1397 = vmul.f32 %v1293, %v1394
    %v1398 = vmul.f32 %v1294, %v1394
    %v1399 = vmul.f32 %v1295, %v1394
    %v1400 = vmul.f32 %v1296, %v1394
    %v1401 = vmul.f32 %v1297, %v1394
    %v1402 = vmul.f32 %v1298, %v1394
    %v1403 = vmul.f32 %v1299, %v1394
    %v1404 = vmul.f32 %v1300, %v1394
    %v1405 = vmul.f32 %v1301, %v1394
    %v1406 = vmul.f32 %v1302, %v1394
    %v1407 = vmul.f32 %v1303, %v1394
    %v1408 = vmul.f32 %v1304, %v1394
    %v1409 = vmul.f32 %v1305, %v1394
    %v1410 = vmul.f32 %v1306, %v1394
    %v1411 = vmul.f32 %v1307, %v1394
    %v1412 = vmul.f32 %v1308, %v1394
    %v1413 = vmul.f32 %v1309, %v1394
    %v1414 = vmul.f32 %v1310, %v1394
    %v1415 = vmul.f32 %v1311, %v1394
    %v1416 = vmul.f32 %v1312, %v1394
    %v1417 = vmul.f32 %v1313, %v1394
    %v1418 = vmul.f32 %v1314, %v1394
    %v1419 = vld [vmem:[%s3] sm:$0x1]
    %v1421 = vlaneseq
    %v1422 = vshrl.u32 %v1421, 7
    %v1423 = vsub.s32 0, %v1422
    %v1424 = vrot.slane %v1419, %v1423
    %v1426 = vmul.f32 %v1395, %v1424
    %v1427 = vmul.f32 %v1396, %v1424
    %v1428 = vmul.f32 %v1397, %v1424
    %v1429 = vmul.f32 %v1398, %v1424
    %v1430 = vmul.f32 %v1399, %v1424
    %v1431 = vmul.f32 %v1400, %v1424
    %v1432 = vmul.f32 %v1401, %v1424
    %v1433 = vmul.f32 %v1402, %v1424
    %v1434 = vmul.f32 %v1403, %v1424
    %v1435 = vmul.f32 %v1404, %v1424
    %v1436 = vmul.f32 %v1405, %v1424
    %v1437 = vmul.f32 %v1406, %v1424
    %v1438 = vmul.f32 %v1407, %v1424
    %v1439 = vmul.f32 %v1408, %v1424
    %v1440 = vmul.f32 %v1409, %v1424
    %v1441 = vmul.f32 %v1410, %v1424
    %v1442 = vmul.f32 %v1411, %v1424
    %v1443 = vmul.f32 %v1412, %v1424
    %v1444 = vmul.f32 %v1413, %v1424
    %v1445 = vmul.f32 %v1414, %v1424
    %v1446 = vmul.f32 %v1415, %v1424
    %v1447 = vmul.f32 %v1416, %v1424
    %v1448 = vmul.f32 %v1417, %v1424
    %v1449 = vmul.f32 %v1418, %v1424
    %v1450 = vld [vmem:[%s4] sm:$0x1]
    %v1452 = vlaneseq
    %v1453 = vshrl.u32 %v1452, 7
    %v1454 = vsub.s32 0, %v1453
    %v1455 = vrot.slane %v1450, %v1454
    %v1457 = vadd.f32 %v1426, %v1455
    %v1458 = vadd.f32 %v1427, %v1455
    %v1459 = vadd.f32 %v1428, %v1455
    %v1460 = vadd.f32 %v1429, %v1455
    %v1461 = vadd.f32 %v1430, %v1455
    %v1462 = vadd.f32 %v1431, %v1455
    %v1463 = vadd.f32 %v1432, %v1455
    %v1464 = vadd.f32 %v1433, %v1455
    %v1465 = vadd.f32 %v1434, %v1455
    %v1466 = vadd.f32 %v1435, %v1455
    %v1467 = vadd.f32 %v1436, %v1455
    %v1468 = vadd.f32 %v1437, %v1455
    %v1469 = vadd.f32 %v1438, %v1455
    %v1470 = vadd.f32 %v1439, %v1455
    %v1471 = vadd.f32 %v1440, %v1455
    %v1472 = vadd.f32 %v1441, %v1455
    %v1473 = vadd.f32 %v1442, %v1455
    %v1474 = vadd.f32 %v1443, %v1455
    %v1475 = vadd.f32 %v1444, %v1455
    %v1476 = vadd.f32 %v1445, %v1455
    %v1477 = vadd.f32 %v1446, %v1455
    %v1478 = vadd.f32 %v1447, %v1455
    %v1479 = vadd.f32 %v1448, %v1455
    %v1480 = vadd.f32 %v1449, %v1455
    %v1481 = vld [vmem:[%s5] sm:$0xff]
    %v1482 = vld [vmem:[%s5 + $0x8] sm:$0xff]
    %v1483 = vld [vmem:[%s5 + $0x10] sm:$0xff]
    %v1484 = vld [vmem:[%s5 + $0x18] sm:$0xff]
    %v1485 = vld [vmem:[%s5 + $0x20] sm:$0xff]
    %v1487 = vsel %vm1235, %v1482, 0
    %v1490 = vsel %vm1235, %v1458, 0
    %v1493 = vsel %vm1235, %v1459, 0
    %v1496 = vsel %vm1235, %v1460, 0
    %v1499 = vsel %vm1235, %v1461, 0
    %v1502 = vsel %vm1235, %v1462, 0
    %v1505 = vsel %vm1235, %v1463, 0
    %v1508 = vsel %vm1235, %v1464, 0
    %v1511 = vsel %vm1235, %v1465, 0
    %v1514 = vsel %vm1235, %v1470, 0
    %v1517 = vsel %vm1235, %v1471, 0
    %v1520 = vsel %vm1235, %v1472, 0
    %v1523 = vsel %vm1235, %v1473, 0
    %v1526 = vsel %vm1235, %v1474, 0
    %v1529 = vsel %vm1235, %v1475, 0
    %v1532 = vsel %vm1235, %v1476, 0
    %v1535 = vsel %vm1235, %v1477, 0
    %1537 = vmatprep.subr.mxu0 0.0
    %1538 = vmatpush1.xpose.msra.mxu0 %v1490
    %1539 = vmatprep.subr.mxu0 0.0
    %1540 = vmatpush1.xpose.msra.mxu0 %v1493
    %1541 = vmatprep.subr.mxu0 0.0
    %1542 = vmatpush1.xpose.msra.mxu0 %v1496
    %1543 = vmatprep.subr.mxu0 0.0
    %1544 = vmatpush1.xpose.msra.mxu0 %v1499
    %1545 = vmatprep.subr.mxu0 0.0
    %1546 = vmatpush1.xpose.msra.mxu0 %v1502
    %1547 = vmatprep.subr.mxu0 0.0
    %1548 = vmatpush1.xpose.msra.mxu0 %v1505
    %1549 = vmatprep.subr.mxu0 0.0
    %1550 = vmatpush1.xpose.msra.mxu0 %v1508
    %1551 = vmatprep.subr.mxu0 0.0
    %1552 = vmatpush1.xpose.msra.mxu0 %v1511
    %1553 = vmatprep.subr.mxu0 0.0
    %1554 = vmatpush1.xpose.msra.mxu0 %v1514
    %1555 = vmatprep.subr.mxu0 0.0
    %1556 = vmatpush1.xpose.msra.mxu0 %v1517
    %1557 = vmatprep.subr.mxu0 0.0
    %1558 = vmatpush1.xpose.msra.mxu0 %v1520
    %1559 = vmatprep.subr.mxu0 0.0
    %1560 = vmatpush1.xpose.msra.mxu0 %v1523
    %1561 = vmatprep.subr.mxu0 0.0
    %1562 = vmatpush1.xpose.msra.mxu0 %v1526
    %1563 = vmatprep.subr.mxu0 0.0
    %1564 = vmatpush1.xpose.msra.mxu0 %v1529
    %1565 = vmatprep.subr.mxu0 0.0
    %1566 = vmatpush1.xpose.msra.mxu0 %v1532
    %1567 = vmatprep.subr.mxu0 0.0
    %1568 = vmatpush1.xpose.msra.mxu0 %v1535
    %1569 = vmatprep.subr.mxu0 0.0
    %1570 = vmatpush1.xpose.msra.mxu0 0.0
    %1571 = vmatprep.subr.mxu0 0.0
    %1572 = vmatpush1.xpose.msra.mxu0 0.0
    %1573 = vmatprep.subr.mxu0 0.0
    %1574 = vmatpush1.xpose.msra.mxu0 0.0
    %1575 = vmatprep.subr.mxu0 0.0
    %1576 = vmatpush1.xpose.msra.mxu0 0.0
    %1577 = vmatprep.subr.mxu0 0.0
    %1578 = vmatpush1.xpose.msra.mxu0 0.0
    %1579 = vmatprep.subr.mxu0 0.0
    %1580 = vmatpush1.xpose.msra.mxu0 0.0
    %1581 = vmatprep.subr.mxu0 0.0
    %1582 = vmatpush1.xpose.msra.mxu0 0.0
    %1583 = vmatprep.subr.mxu0 0.0
    %1584 = vmatpush1.xpose.msra.mxu0 0.0
    %1585 = vmatprep.subr.mxu0 0.0
    %1586 = vmatpush1.xpose.msra.mxu0 0.0
    %1587 = vmatprep.subr.mxu0 0.0
    %1588 = vmatpush1.xpose.msra.mxu0 0.0
    %1589 = vmatprep.subr.mxu0 0.0
    %1590 = vmatpush1.xpose.msra.mxu0 0.0
    %1591 = vmatprep.subr.mxu0 0.0
    %1592 = vmatpush1.xpose.msra.mxu0 0.0
    %1593 = vmatprep.subr.mxu0 0.0
    %1594 = vmatpush1.xpose.msra.mxu0 0.0
    %1595 = vmatprep.subr.mxu0 0.0
    %1596 = vmatpush1.xpose.msra.mxu0 0.0
    %1597 = vmatprep.subr.mxu0 0.0
    %1598 = vmatpush1.xpose.msra.mxu0 0.0
    %1599 = vmatprep.subr.mxu0 0.0
    %1600 = vmatpush1.xpose.msra.mxu0 0.0
    %1601 = vmatprep.mubr.f32.mxu0 0.0
    %1602 = vmatmul.mubr.f32.gmra.mrb[0].mxu0 %v1487
    %v1603 = vpop.f32.mrb[0].mxu0
    %v1604 = vadd.f32 0.0, %v1603
    %v1605 = vpop.f32.mrb[0].mxu0
    %1606 = vdwg.mxu0
    %v1608 = vsel %vm1235, %v1481, 0
    %v1611 = vsel %vm1235, %v1457, 0
    %v1614 = vsel %vm1235, %v1469, 0
    %1616 = vmatprep.subr.mxu0 0.0
    %1617 = vmatpush1.xpose.msra.mxu0 %v1611
    %1618 = vmatprep.subr.mxu0 0.0
    %1619 = vmatpush1.xpose.msra.mxu0 %v1490
    %1620 = vmatprep.subr.mxu0 0.0
    %1621 = vmatpush1.xpose.msra.mxu0 %v1493
    %1622 = vmatprep.subr.mxu0 0.0
    %1623 = vmatpush1.xpose.msra.mxu0 %v1496
    %1624 = vmatprep.subr.mxu0 0.0
    %1625 = vmatpush1.xpose.msra.mxu0 %v1499
    %1626 = vmatprep.subr.mxu0 0.0
    %1627 = vmatpush1.xpose.msra.mxu0 %v1502
    %1628 = vmatprep.subr.mxu0 0.0
    %1629 = vmatpush1.xpose.msra.mxu0 %v1505
    %1630 = vmatprep.subr.mxu0 0.0
    %1631 = vmatpush1.xpose.msra.mxu0 %v1508
    %1632 = vmatprep.subr.mxu0 0.0
    %1633 = vmatpush1.xpose.msra.mxu0 %v1614
    %1634 = vmatprep.subr.mxu0 0.0
    %1635 = vmatpush1.xpose.msra.mxu0 %v1514
    %1636 = vmatprep.subr.mxu0 0.0
    %1637 = vmatpush1.xpose.msra.mxu0 %v1517
    %1638 = vmatprep.subr.mxu0 0.0
    %1639 = vmatpush1.xpose.msra.mxu0 %v1520
    %1640 = vmatprep.subr.mxu0 0.0
    %1641 = vmatpush1.xpose.msra.mxu0 %v1523
    %1642 = vmatprep.subr.mxu0 0.0
    %1643 = vmatpush1.xpose.msra.mxu0 %v1526
    %1644 = vmatprep.subr.mxu0 0.0
    %1645 = vmatpush1.xpose.msra.mxu0 %v1529
    %1646 = vmatprep.subr.mxu0 0.0
    %1647 = vmatpush1.xpose.msra.mxu0 %v1532
    %1648 = vmatprep.subr.mxu0 0.0
    %1649 = vmatpush1.xpose.msra.mxu0 0.0
    %1650 = vmatprep.subr.mxu0 0.0
    %1651 = vmatpush1.xpose.msra.mxu0 0.0
    %1652 = vmatprep.subr.mxu0 0.0
    %1653 = vmatpush1.xpose.msra.mxu0 0.0
    %1654 = vmatprep.subr.mxu0 0.0
    %1655 = vmatpush1.xpose.msra.mxu0 0.0
    %1656 = vmatprep.subr.mxu0 0.0
    %1657 = vmatpush1.xpose.msra.mxu0 0.0
    %1658 = vmatprep.subr.mxu0 0.0
    %1659 = vmatpush1.xpose.msra.mxu0 0.0
    %1660 = vmatprep.subr.mxu0 0.0
    %1661 = vmatpush1.xpose.msra.mxu0 0.0
    %1662 = vmatprep.subr.mxu0 0.0
    %1663 = vmatpush1.xpose.msra.mxu0 0.0
    %1664 = vmatprep.subr.mxu0 0.0
    %1665 = vmatpush1.xpose.msra.mxu0 0.0
    %1666 = vmatprep.subr.mxu0 0.0
    %1667 = vmatpush1.xpose.msra.mxu0 0.0
    %1668 = vmatprep.subr.mxu0 0.0
    %1669 = vmatpush1.xpose.msra.mxu0 0.0
    %1670 = vmatprep.subr.mxu0 0.0
    %1671 = vmatpush1.xpose.msra.mxu0 0.0
    %1672 = vmatprep.subr.mxu0 0.0
    %1673 = vmatpush1.xpose.msra.mxu0 0.0
    %1674 = vmatprep.subr.mxu0 0.0
    %1675 = vmatpush1.xpose.msra.mxu0 0.0
    %1676 = vmatprep.subr.mxu0 0.0
    %1677 = vmatpush1.xpose.msra.mxu0 0.0
    %1678 = vmatprep.subr.mxu0 0.0
    %1679 = vmatpush1.xpose.msra.mxu0 0.0
    %1680 = vmatprep.mubr.f32.mxu0 0.0
    %1681 = vmatmul.mubr.f32.gmra.mrb[0].mxu0 %v1608
    %v1682 = vpop.f32.mrb[0].mxu0
    %v1683 = vadd.f32 %v1604, %v1682
    %v1684 = vpop.f32.mrb[0].mxu0
    %1685 = vdwg.mxu0
    %v1687 = vsel %vm1235, %v1483, 0
    %v1690 = vsel %vm1235, %v1466, 0
    %v1693 = vsel %vm1235, %v1478, 0
    %1695 = vmatprep.subr.mxu0 0.0
    %1696 = vmatpush1.xpose.msra.mxu0 %v1493
    %1697 = vmatprep.subr.mxu0 0.0
    %1698 = vmatpush1.xpose.msra.mxu0 %v1496
    %1699 = vmatprep.subr.mxu0 0.0
    %1700 = vmatpush1.xpose.msra.mxu0 %v1499
    %1701 = vmatprep.subr.mxu0 0.0
    %1702 = vmatpush1.xpose.msra.mxu0 %v1502
    %1703 = vmatprep.subr.mxu0 0.0
    %1704 = vmatpush1.xpose.msra.mxu0 %v1505
    %1705 = vmatprep.subr.mxu0 0.0
    %1706 = vmatpush1.xpose.msra.mxu0 %v1508
    %1707 = vmatprep.subr.mxu0 0.0
    %1708 = vmatpush1.xpose.msra.mxu0 %v1511
    %1709 = vmatprep.subr.mxu0 0.0
    %1710 = vmatpush1.xpose.msra.mxu0 %v1690
    %1711 = vmatprep.subr.mxu0 0.0
    %1712 = vmatpush1.xpose.msra.mxu0 %v1517
    %1713 = vmatprep.subr.mxu0 0.0
    %1714 = vmatpush1.xpose.msra.mxu0 %v1520
    %1715 = vmatprep.subr.mxu0 0.0
    %1716 = vmatpush1.xpose.msra.mxu0 %v1523
    %1717 = vmatprep.subr.mxu0 0.0
    %1718 = vmatpush1.xpose.msra.mxu0 %v1526
    %1719 = vmatprep.subr.mxu0 0.0
    %1720 = vmatpush1.xpose.msra.mxu0 %v1529
    %1721 = vmatprep.subr.mxu0 0.0
    %1722 = vmatpush1.xpose.msra.mxu0 %v1532
    %1723 = vmatprep.subr.mxu0 0.0
    %1724 = vmatpush1.xpose.msra.mxu0 %v1535
    %1725 = vmatprep.subr.mxu0 0.0
    %1726 = vmatpush1.xpose.msra.mxu0 %v1693
    %1727 = vmatprep.subr.mxu0 0.0
    %1728 = vmatpush1.xpose.msra.mxu0 0.0
    %1729 = vmatprep.subr.mxu0 0.0
    %1730 = vmatpush1.xpose.msra.mxu0 0.0
    %1731 = vmatprep.subr.mxu0 0.0
    %1732 = vmatpush1.xpose.msra.mxu0 0.0
    %1733 = vmatprep.subr.mxu0 0.0
    %1734 = vmatpush1.xpose.msra.mxu0 0.0
    %1735 = vmatprep.subr.mxu0 0.0
    %1736 = vmatpush1.xpose.msra.mxu0 0.0
    %1737 = vmatprep.subr.mxu0 0.0
    %1738 = vmatpush1.xpose.msra.mxu0 0.0
    %1739 = vmatprep.subr.mxu0 0.0
    %1740 = vmatpush1.xpose.msra.mxu0 0.0
    %1741 = vmatprep.subr.mxu0 0.0
    %1742 = vmatpush1.xpose.msra.mxu0 0.0
    %1743 = vmatprep.subr.mxu0 0.0
    %1744 = vmatpush1.xpose.msra.mxu0 0.0
    %1745 = vmatprep.subr.mxu0 0.0
    %1746 = vmatpush1.xpose.msra.mxu0 0.0
    %1747 = vmatprep.subr.mxu0 0.0
    %1748 = vmatpush1.xpose.msra.mxu0 0.0
    %1749 = vmatprep.subr.mxu0 0.0
    %1750 = vmatpush1.xpose.msra.mxu0 0.0
    %1751 = vmatprep.subr.mxu0 0.0
    %1752 = vmatpush1.xpose.msra.mxu0 0.0
    %1753 = vmatprep.subr.mxu0 0.0
    %1754 = vmatpush1.xpose.msra.mxu0 0.0
    %1755 = vmatprep.subr.mxu0 0.0
    %1756 = vmatpush1.xpose.msra.mxu0 0.0
    %1757 = vmatprep.subr.mxu0 0.0
    %1758 = vmatpush1.xpose.msra.mxu0 0.0
    %1759 = vmatprep.mubr.f32.mxu0 0.0
    %1760 = vmatmul.mubr.f32.gmra.mrb[0].mxu0 %v1687
    %v1761 = vpop.f32.mrb[0].mxu0
    %v1762 = vadd.f32 0.0, %v1761
    %v1763 = vpop.f32.mrb[0].mxu0
    %1764 = vdwg.mxu0
    %v1765 = vadd.f32 %v1683, %v1762
    %v1767 = vsel %vm1235, %v1484, 0
    %v1770 = vsel %vm1235, %v1467, 0
    %v1773 = vsel %vm1235, %v1479, 0
    %1775 = vmatprep.subr.mxu0 0.0
    %1776 = vmatpush1.xpose.msra.mxu0 %v1496
    %1777 = vmatprep.subr.mxu0 0.0
    %1778 = vmatpush1.xpose.msra.mxu0 %v1499
    %1779 = vmatprep.subr.mxu0 0.0
    %1780 = vmatpush1.xpose.msra.mxu0 %v1502
    %1781 = vmatprep.subr.mxu0 0.0
    %1782 = vmatpush1.xpose.msra.mxu0 %v1505
    %1783 = vmatprep.subr.mxu0 0.0
    %1784 = vmatpush1.xpose.msra.mxu0 %v1508
    %1785 = vmatprep.subr.mxu0 0.0
    %1786 = vmatpush1.xpose.msra.mxu0 %v1511
    %1787 = vmatprep.subr.mxu0 0.0
    %1788 = vmatpush1.xpose.msra.mxu0 %v1690
    %1789 = vmatprep.subr.mxu0 0.0
    %1790 = vmatpush1.xpose.msra.mxu0 %v1770
    %1791 = vmatprep.subr.mxu0 0.0
    %1792 = vmatpush1.xpose.msra.mxu0 %v1520
    %1793 = vmatprep.subr.mxu0 0.0
    %1794 = vmatpush1.xpose.msra.mxu0 %v1523
    %1795 = vmatprep.subr.mxu0 0.0
    %1796 = vmatpush1.xpose.msra.mxu0 %v1526
    %1797 = vmatprep.subr.mxu0 0.0
    %1798 = vmatpush1.xpose.msra.mxu0 %v1529
    %1799 = vmatprep.subr.mxu0 0.0
    %1800 = vmatpush1.xpose.msra.mxu0 %v1532
    %1801 = vmatprep.subr.mxu0 0.0
    %1802 = vmatpush1.xpose.msra.mxu0 %v1535
    %1803 = vmatprep.subr.mxu0 0.0
    %1804 = vmatpush1.xpose.msra.mxu0 %v1693
    %1805 = vmatprep.subr.mxu0 0.0
    %1806 = vmatpush1.xpose.msra.mxu0 %v1773
    %1807 = vmatprep.subr.mxu0 0.0
    %1808 = vmatpush1.xpose.msra.mxu0 0.0
    %1809 = vmatprep.subr.mxu0 0.0
    %1810 = vmatpush1.xpose.msra.mxu0 0.0
    %1811 = vmatprep.subr.mxu0 0.0
    %1812 = vmatpush1.xpose.msra.mxu0 0.0
    %1813 = vmatprep.subr.mxu0 0.0
    %1814 = vmatpush1.xpose.msra.mxu0 0.0
    %1815 = vmatprep.subr.mxu0 0.0
    %1816 = vmatpush1.xpose.msra.mxu0 0.0
    %1817 = vmatprep.subr.mxu0 0.0
    %1818 = vmatpush1.xpose.msra.mxu0 0.0
    %1819 = vmatprep.subr.mxu0 0.0
    %1820 = vmatpush1.xpose.msra.mxu0 0.0
    %1821 = vmatprep.subr.mxu0 0.0
    %1822 = vmatpush1.xpose.msra.mxu0 0.0
    %1823 = vmatprep.subr.mxu0 0.0
    %1824 = vmatpush1.xpose.msra.mxu0 0.0
    %1825 = vmatprep.subr.mxu0 0.0
    %1826 = vmatpush1.xpose.msra.mxu0 0.0
    %1827 = vmatprep.subr.mxu0 0.0
    %1828 = vmatpush1.xpose.msra.mxu0 0.0
    %1829 = vmatprep.subr.mxu0 0.0
    %1830 = vmatpush1.xpose.msra.mxu0 0.0
    %1831 = vmatprep.subr.mxu0 0.0
    %1832 = vmatpush1.xpose.msra.mxu0 0.0
    %1833 = vmatprep.subr.mxu0 0.0
    %1834 = vmatpush1.xpose.msra.mxu0 0.0
    %1835 = vmatprep.subr.mxu0 0.0
    %1836 = vmatpush1.xpose.msra.mxu0 0.0
    %1837 = vmatprep.subr.mxu0 0.0
    %1838 = vmatpush1.xpose.msra.mxu0 0.0
    %1839 = vmatprep.mubr.f32.mxu0 0.0
    %1840 = vmatmul.mubr.f32.gmra.mrb[0].mxu0 %v1767
    %v1841 = vpop.f32.mrb[0].mxu0
    %v1842 = vadd.f32 0.0, %v1841
    %v1843 = vpop.f32.mrb[0].mxu0
    %1844 = vdwg.mxu0
    %v1845 = vadd.f32 %v1765, %v1842
    %v1847 = vsel %vm1235, %v1485, 0
    %v1850 = vsel %vm1235, %v1468, 0
    %v1853 = vsel %vm1235, %v1480, 0
    %1855 = vmatprep.subr.mxu0 0.0
    %1856 = vmatpush1.xpose.msra.mxu0 %v1499
    %1857 = vmatprep.subr.mxu0 0.0
    %1858 = vmatpush1.xpose.msra.mxu0 %v1502
    %1859 = vmatprep.subr.mxu0 0.0
    %1860 = vmatpush1.xpose.msra.mxu0 %v1505
    %1861 = vmatprep.subr.mxu0 0.0
    %1862 = vmatpush1.xpose.msra.mxu0 %v1508
    %1863 = vmatprep.subr.mxu0 0.0
    %1864 = vmatpush1.xpose.msra.mxu0 %v1511
    %1865 = vmatprep.subr.mxu0 0.0
    %1866 = vmatpush1.xpose.msra.mxu0 %v1690
    %1867 = vmatprep.subr.mxu0 0.0
    %1868 = vmatpush1.xpose.msra.mxu0 %v1770
    %1869 = vmatprep.subr.mxu0 0.0
    %1870 = vmatpush1.xpose.msra.mxu0 %v1850
    %1871 = vmatprep.subr.mxu0 0.0
    %1872 = vmatpush1.xpose.msra.mxu0 %v1523
    %1873 = vmatprep.subr.mxu0 0.0
    %1874 = vmatpush1.xpose.msra.mxu0 %v1526
    %1875 = vmatprep.subr.mxu0 0.0
    %1876 = vmatpush1.xpose.msra.mxu0 %v1529
    %1877 = vmatprep.subr.mxu0 0.0
    %1878 = vmatpush1.xpose.msra.mxu0 %v1532
    %1879 = vmatprep.subr.mxu0 0.0
    %1880 = vmatpush1.xpose.msra.mxu0 %v1535
    %1881 = vmatprep.subr.mxu0 0.0
    %1882 = vmatpush1.xpose.msra.mxu0 %v1693
    %1883 = vmatprep.subr.mxu0 0.0
    %1884 = vmatpush1.xpose.msra.mxu0 %v1773
    %1885 = vmatprep.subr.mxu0 0.0
    %1886 = vmatpush1.xpose.msra.mxu0 %v1853
    %1887 = vmatprep.subr.mxu0 0.0
    %1888 = vmatpush1.xpose.msra.mxu0 0.0
    %1889 = vmatprep.subr.mxu0 0.0
    %1890 = vmatpush1.xpose.msra.mxu0 0.0
    %1891 = vmatprep.subr.mxu0 0.0
    %1892 = vmatpush1.xpose.msra.mxu0 0.0
    %1893 = vmatprep.subr.mxu0 0.0
    %1894 = vmatpush1.xpose.msra.mxu0 0.0
    %1895 = vmatprep.subr.mxu0 0.0
    %1896 = vmatpush1.xpose.msra.mxu0 0.0
    %1897 = vmatprep.subr.mxu0 0.0
    %1898 = vmatpush1.xpose.msra.mxu0 0.0
    %1899 = vmatprep.subr.mxu0 0.0
    %1900 = vmatpush1.xpose.msra.mxu0 0.0
    %1901 = vmatprep.subr.mxu0 0.0
    %1902 = vmatpush1.xpose.msra.mxu0 0.0
    %1903 = vmatprep.subr.mxu0 0.0
    %1904 = vmatpush1.xpose.msra.mxu0 0.0
    %1905 = vmatprep.subr.mxu0 0.0
    %1906 = vmatpush1.xpose.msra.mxu0 0.0
    %1907 = vmatprep.subr.mxu0 0.0
    %1908 = vmatpush1.xpose.msra.mxu0 0.0
    %1909 = vmatprep.subr.mxu0 0.0
    %1910 = vmatpush1.xpose.msra.mxu0 0.0
    %1911 = vmatprep.subr.mxu0 0.0
    %1912 = vmatpush1.xpose.msra.mxu0 0.0
    %1913 = vmatprep.subr.mxu0 0.0
    %1914 = vmatpush1.xpose.msra.mxu0 0.0
    %1915 = vmatprep.subr.mxu0 0.0
    %1916 = vmatpush1.xpose.msra.mxu0 0.0
    %1917 = vmatprep.subr.mxu0 0.0
    %1918 = vmatpush1.xpose.msra.mxu0 0.0
    %1919 = vmatprep.mubr.f32.mxu0 0.0
    %1920 = vmatmul.mubr.f32.gmra.mrb[0].mxu0 %v1847
    %v1921 = vpop.f32.mrb[0].mxu0
    %v1922 = vadd.f32 0.0, %v1921
    %v1923 = vpop.f32.mrb[0].mxu0
    %1924 = vdwg.mxu0
    %v1925 = vadd.f32 %v1845, %v1922
    %v1926 = vld [vmem:[%s6] sm:$0xff]
    %1928 = vset.pattern.permute.xlu0 0
    %1929 = vperm.xlu0 %1928, %v1926
    %v1930 = vpop.permute.xlu0 %1929
    %v1932 = vadd.f32 %v1925, %v1930
    %v1933 = vmax.f32 %v1932, 0.0
    %1934 = vadd.xlane.f32.xlu0 %v1933
    %v1935 = vpop.xlane.xlu0 %1934
    %v1936 = vrcp.pop 128.0
    %v1937 = vmul.f32 %v1935, %v1936
    %v1938 = vsub.f32 %v1933, %v1937
    %v1939 = vmul.f32 %v1938, %v1938
    %1940 = vadd.xlane.f32.xlu0 %v1939
    %v1941 = vpop.xlane.xlu0 %1940
    %v1942 = vmul.f32 %v1941, %v1936
    %v1943 = vadd.f32 %v1942, 1e-05
    %v1944 = vrsqrt.pop %v1943
    %v1945 = vmul.f32 %v1938, %v1944
    %v1946 = vld [vmem:[%s7] sm:$0xff]
    %1948 = vset.pattern.permute.xlu0 0
    %1949 = vperm.xlu0 %1948, %v1946
    %v1950 = vpop.permute.xlu0 %1949
    %v1952 = vmul.f32 %v1945, %v1950
    %v1953 = vld [vmem:[%s8] sm:$0xff]
    %1955 = vset.pattern.permute.xlu0 0
    %1956 = vperm.xlu0 %1955, %v1953
    %v1957 = vpop.permute.xlu0 %1956
    %v1959 = vadd.f32 %v1952, %v1957
    %1960 = vst [vmem:[#allocation2] sm:$0xff] %v1959
    // Predicated region
    $region38: #{tpu_custom_call.1} parent=1 // pred_check
      _
    $region39: #{tpu_custom_call.1} parent=1 // pred_check_branch
      %1962 = sbr.rel (0) target = $region41
    $region40: #{tpu_custom_call.1} parent=1 // pred_region
      %s1964 = ssub.s32 128, 128
      %1965 = vsyncadd [#allocation3], %s1964
      %s1967 = sshll.u32 [#allocation2], 4
      %s1968 = int_to_ptr.vmem [resolvable:$true] %s1967
      %1970 = dma.vmem_to_hbm [thread:$0]  %s1968, 128, %s9, [#allocation3]
    $region41: #{tpu_custom_call.1} parent=1 // pred_fallthru
      _
    // Predicated region
    $region42: #{tpu_custom_call.1} parent=1 // pred_check
      _
    $region43: #{tpu_custom_call.1} parent=1 // pred_check_branch
      %1972 = sbr.rel (0) target = $region45
    $region44: #{tpu_custom_call.1} parent=1 // pred_region
      %1973 = dma.done [#allocation3], 128
    $region45: #{tpu_custom_call.1} parent=1 // pred_fallthru
      _
    %1974 = vsyncpa [#allocation3], 1

</llo_original>
